<compile_context>
chip_gen: v6e
topology: v6e:2x2x1
jax: 0.10.0
libtpu: 0.0.40
codegen_flags: <defaults>
</compile_context>

<pallas_src>
import functools

import jax
import jax.numpy as jnp
from jax.experimental import pallas as pl
from jax.experimental.pallas import tpu as pltpu


# ----------------------------- small helpers -------------------------------
def _round_up(x, m):
    return (x + m - 1) // m * m


def _leaky_relu(x, slope=0.01):
    return jnp.where(x >= 0, x, slope * x)


def _sigmoid(x):
    # 1 / (1 + exp(-x)); approx reciprocal lowers to the EUP vrcp slot.
    return pl.reciprocal(1.0 + jnp.exp(-x), approx=True)


# --------------------------------- kernel ----------------------------------
def laftr_kernel(
    ay_ref,            # SMEM (2, 2) group/label weight table
    xaux_ref,          # VMEM (D+3, TB): rows = [X (D), Y, A, valid-mask]
    w_ref,             # VMEM (R, C)  packed weight slab (static row offsets)
    b_ref,             # VMEM (R, 1)  packed bias slab (same row offsets)
    out_ref,           # VMEM (1, 2, TB): row0 = sigmoid(Y_logits), row1 = loss terms
    *, d, e0, e1, zdim, s, offs, fair_coeff, class_coeff, inv_batch,
):
    x = xaux_ref[0:d, :]             # (D, TB)  batch on lanes
    y = xaux_ref[d:d + 1, :]         # (1, TB)  float {0,1}
    a = xaux_ref[d + 1:d + 2, :]     # (1, TB)  float {0,1}
    vm = xaux_ref[d + 2:d + 3, :]    # (1, TB)  1.0 real row, 0.0 batch padding

    def layer(idx, out_n, in_n, h, act=True):
        r = offs[idx]
        w = w_ref[r:r + out_n, 0:in_n]
        b = b_ref[r:r + out_n, :]
        o = jnp.dot(w, h, preferred_element_type=jnp.float32) + b
        return _leaky_relu(o) if act else o

    # ----- encoder: X -> Z  (all activations are (feat, TB)) -----
    h = layer(0, e0, d, x)
    h = layer(1, e1, e0, h)
    z = layer(2, zdim, e1, h, act=False)                 # (zdim, TB)

    # ----- fused classifier + discriminator (independent after Z) -----
    zy = jnp.concatenate([z, y], axis=0)                 # cat([Z, Y]) -> (zdim+1, TB)
    h = layer(3, s, zdim + 1, zy)                        # stacked layer 0
    h = layer(4, s, s, h)                                # block-diagonal layer 1
    logits = layer(5, 2, s, h, act=False)                # stacked width-1 heads (2, TB)
    y_logits = logits[0:1, :]
    a_logits = logits[1:2, :]

    e_y = jnp.exp(-y_logits)
    y_hat = pl.reciprocal(1.0 + e_y, approx=True)        # sigmoid(Y_logits)
    a_hat = _sigmoid(a_logits)

    # BCE from logits (reuses exp(-y_logits)): softplus(x) - y*x = (1-y)*x + log(1+e)
    ce_terms = (1.0 - y) * y_logits + jnp.log(1.0 + e_y)           # (1, TB)

    # weighted audit loss (arch == 'laftr-eqodd')
    w00 = ay_ref[0, 0]
    w01 = ay_ref[0, 1]
    w10 = ay_ref[1, 0]
    w11 = ay_ref[1, 1]
    wts = (w00 * (1.0 - a) * (1.0 - y) + w01 * (1.0 - a) * y
           + w10 * a * (1.0 - y) + w11 * a * y)                    # (1, TB)
    aud = -fair_coeff * jnp.abs(a - a_hat)                         # (1, TB)

    # per-element loss contributions (masked); wrapper sums them.
    loss_row = vm * (class_coeff * ce_terms + aud * wts * inv_batch)

    out_ref[0, 0:1, :] = y_hat
    out_ref[0, 1:2, :] = loss_row


# -------------------------------- wrapper -----------------------------------
def laftr_forward(params, ay_wts, x, y, a, *, fair_coeff=1.0, class_coeff=1.0,
                  tb=512):
    """LaftrNet forward. Returns (sigmoid(Y_logits)[B], scalar loss)."""
    B, D = x.shape
    (enc_ws, enc_bs), (cls_ws, cls_bs), (disc_ws, disc_bs) = params
    assert len(enc_ws) == 3 and len(cls_ws) == 3 and len(disc_ws) == 3, (
        "kernel is specialized for edepth=cdepth=adepth=2 (3-layer MLPs)")
    zdim = enc_ws[-1].shape[1]
    assert cls_ws[-1].shape[1] == 1, "kernel assumes num_classes == 2 (width-1 head)"
    assert disc_ws[-1].shape[1] == 1, "kernel assumes num_groups == 2 (width-1 head)"
    assert disc_ws[0].shape[0] == zdim + 1, (
        "kernel assumes arch != 'laftr-dp' (discriminator sees cat([Z, Y]))")

    e0 = enc_ws[0].shape[1]
    e1 = enc_ws[1].shape[1]
    cw = cls_ws[0].shape[1]
    aw = disc_ws[0].shape[1]
    s = cw + aw

    f32 = lambda v: jnp.asarray(v, jnp.float32)

    # ----- fused weight blocks, all in (out, in) layout -----
    sw0 = jnp.concatenate(
        [jnp.concatenate([f32(cls_ws[0]).T, jnp.zeros((cw, 1), jnp.float32)], axis=1),
         f32(disc_ws[0]).T], axis=0)                                  # (s, zdim+1)
    sb0 = jnp.concatenate([f32(cls_bs[0]), f32(disc_bs[0])])
    sw1 = jnp.zeros((s, s), jnp.float32)
    sw1 = sw1.at[:cw, :cw].set(f32(cls_ws[1]).T).at[cw:, cw:].set(f32(disc_ws[1]).T)
    sb1 = jnp.concatenate([f32(cls_bs[1]), f32(disc_bs[1])])
    hw = jnp.zeros((2, s), jnp.float32)
    hw = hw.at[0, :cw].set(f32(cls_ws[2])[:, 0]).at[1, cw:].set(f32(disc_ws[2])[:, 0])
    hb = jnp.stack([f32(cls_bs[2])[0], f32(disc_bs[2])[0]])

    blocks = [
        (f32(enc_ws[0]).T, f32(enc_bs[0])),   # (e0, D)
        (f32(enc_ws[1]).T, f32(enc_bs[1])),   # (e1, e0)
        (f32(enc_ws[2]).T, f32(enc_bs[2])),   # (zdim, e1)
        (sw0, sb0),                           # (s, zdim+1)
        (sw1, sb1),                           # (s, s)
        (hw, hb),                             # (2, s)
    ]

    # ----- pack all weights / biases into two resident slabs (8-aligned rows) -----
    offs, r = [], 0
    for w, _ in blocks:
        offs.append(r)
        r = _round_up(r + w.shape[0], 8)
    R = r
    C = max(w.shape[1] for w, _ in blocks)
    wslab = jnp.zeros((R, C), jnp.float32)
    bslab = jnp.zeros((R, 1), jnp.float32)
    for (w, b), ro in zip(blocks, offs):
        wslab = wslab.at[ro:ro + w.shape[0], 0:w.shape[1]].set(w)
        bslab = bslab.at[ro:ro + w.shape[0], 0].set(b)

    # ----- batch tiling: lane-dense, >=512 and a 512-multiple (fills MXU N) -----
    TB = min(_round_up(int(tb), 512), _round_up(B, 512))
    Bpad = _round_up(B, TB)
    num_tiles = Bpad // TB

    # streamed slab: rows = [X (D), Y, A, valid-mask], batch on lanes
    xaux = jnp.concatenate(
        [f32(x).T, f32(y).reshape(1, B), f32(a).reshape(1, B),
         jnp.ones((1, B), jnp.float32)], axis=0)
    xaux = jnp.pad(xaux, ((0, 0), (0, Bpad - B)))

    kernel = functools.partial(
        laftr_kernel, d=D, e0=e0, e1=e1, zdim=zdim, s=s, offs=tuple(offs),
        fair_coeff=float(fair_coeff), class_coeff=float(class_coeff),
        inv_batch=1.0 / float(B))

    out = pl.pallas_call(
        kernel,
        out_shape=jax.ShapeDtypeStruct((num_tiles, 2, TB), jnp.float32),
        grid_spec=pltpu.PrefetchScalarGridSpec(
            num_scalar_prefetch=0,
            grid=(num_tiles,),
            in_specs=[
                pl.BlockSpec(memory_space=pltpu.MemorySpace.SMEM),    # AY table
                pl.BlockSpec((D + 3, TB), lambda i: (0, i)),          # streamed X/Y/A/mask
                pl.BlockSpec((R, C), lambda i: (0, 0)),               # resident weight slab
                pl.BlockSpec((R, 1), lambda i: (0, 0)),               # resident bias slab
            ],
            out_specs=pl.BlockSpec((1, 2, TB), lambda i: (i, 0, 0))),
        compiler_params=pltpu.CompilerParams(
            dimension_semantics=("parallel",),        # megacore-shardable on v7x
            vmem_limit_bytes=32 * 1024 * 1024),
    )(f32(ay_wts), xaux, wslab, bslab)

    logits = out[:, 0, :].reshape(-1)[:B]
    loss = jnp.sum(out[:, 1, :])       # tiny cross-tile/lane reduce outside the kernel
    return logits, loss


# ---------------------- deterministic parameter init ------------------------
def init_mlp(key, neurons):
    ws, bs = [], []
    for i in range(len(neurons) - 1):
        key, kw, kb = jax.random.split(key, 3)
        fan_in = neurons[i]
        scale = 1.0 / jnp.sqrt(fan_in)
        ws.append(jax.random.uniform(kw, (neurons[i], neurons[i + 1]),
                                     jnp.float32, -scale, scale))
        bs.append(jax.random.uniform(kb, (neurons[i + 1],),
                                     jnp.float32, -scale, scale))
    return ws, bs


# ------------------------- pure-JAX reference (check) ------------------------
def reference_forward(params, ay_wts, x, y, a, *, fair_coeff, class_coeff, eps=1e-8):
    (enc_ws, enc_bs), (cls_ws, cls_bs), (disc_ws, disc_bs) = params

    def mlp(h, ws, bs):
        for i, (w, b) in enumerate(zip(ws, bs)):
            h = h @ w + b
            if i < len(ws) - 1:
                h = jnp.where(h >= 0, h, 0.01 * h)
        return h

    z = mlp(x, enc_ws, enc_bs)
    y_logits = mlp(z, cls_ws, cls_bs)[:, 0]
    y_hat = jax.nn.sigmoid(y_logits)
    ce = -jnp.sum(y * jnp.log(y_hat + eps) + (1 - y) * jnp.log(1 - y_hat + eps))
    class_loss = class_coeff * ce
    z_cat = jnp.concatenate([z, y[:, None]], axis=1)
    a_logits = mlp(z_cat, disc_ws, disc_bs)[:, 0]
    a_hat = jax.nn.sigmoid(a_logits)
    aud = -fair_coeff * jnp.abs(a - a_hat)
    wts = (ay_wts[0, 0] * (1 - a) * (1 - y) + ay_wts[0, 1] * (1 - a) * y
           + ay_wts[1, 0] * a * (1 - y) + ay_wts[1, 1] * a * y)
    loss = class_loss + jnp.mean(aud * wts)
    return y_hat, loss


# ----------------------------------- main ------------------------------------
if __name__ == "__main__":
    # small LAFTR config; B=300 -> a single 512-lane batch tile (padding masked).
    B, input_dim = 300, 16
    edepth, ewidths, zdim = 2, 32, 8
    cdepth, cwidths, num_classes = 2, 32, 2
    adepth, awidths, num_groups = 2, 32, 2
    fair_coeff = 1.0

    enc_neurons = [input_dim] + edepth * [ewidths] + [zdim]
    cls_neurons = [zdim] + cdepth * [cwidths] + [num_classes - 1]
    adv_neurons = [zdim + num_classes - 1] + adepth * [awidths] + [num_groups - 1]

    key = jax.random.PRNGKey(0)
    k_e, k_c, k_d, k_x, k_y, k_a = jax.random.split(key, 6)
    params = (init_mlp(k_e, enc_neurons),
              init_mlp(k_c, cls_neurons),
              init_mlp(k_d, adv_neurons))

    X = jax.random.normal(k_x, (B, input_dim), jnp.float32)
    Y = jax.random.bernoulli(k_y, 0.5, (B,)).astype(jnp.float32)
    A = jax.random.bernoulli(k_a, 0.5, (B,)).astype(jnp.float32)
    AY_wts = jnp.array([[0.3, 0.7], [0.6, 0.4]], jnp.float32)

    logits, loss = laftr_forward(params, AY_wts, X, Y, A,
                                 fair_coeff=fair_coeff, class_coeff=1.0)
    jax.block_until_ready((logits, loss))

    ref_logits, ref_loss = reference_forward(params, AY_wts, X, Y, A,
                                             fair_coeff=fair_coeff, class_coeff=1.0)
    # tolerances account for the approx EUP reciprocal in the sigmoids.
    assert jnp.allclose(logits, ref_logits, atol=5e-3, rtol=1e-3), (
        float(jnp.max(jnp.abs(logits - ref_logits))))
    assert jnp.allclose(loss, ref_loss, atol=1e-2, rtol=1e-3), (
        float(loss), float(ref_loss))
    print("KERNEL_OK")
</pallas_src>

<mosaic_0001>
module attributes {stable_mosaic.version = 11 : i64} {
  func.func @laftr_kernel(%arg0: i32, %arg1: memref<2x2xf32, #tpu.memory_space<smem>>, %arg2: memref<19x512xf32, #tpu.memory_space<vmem>>, %arg3: memref<208x64xf32, #tpu.memory_space<vmem>>, %arg4: memref<208x1xf32, #tpu.memory_space<vmem>>, %arg5: memref<1x2x512xf32, #tpu.memory_space<vmem>>) attributes {dimension_semantics = [#tpu.dimension_semantics<parallel>], iteration_bounds = array<i64: 1>, scalar_prefetch = 0 : i64, scratch_operands = 0 : i64, tpu.core_type = #tpu.core_type<tc>, window_params = [{transform_indices = @transform_0, window_bounds = array<i64: 2, 2>}, {transform_indices = @transform_1, window_bounds = array<i64: 19, 512>}, {pipeline_mode = #tpu.pipeline_mode<synchronous>, transform_indices = @transform_2, window_bounds = array<i64: 208, 64>}, {pipeline_mode = #tpu.pipeline_mode<synchronous>, transform_indices = @transform_3, window_bounds = array<i64: 208, 1>}, {transform_indices = @transform_4, window_bounds = array<i64: 1, 2, 512>}]} {
    %c0 = arith.constant 0 : index
    %c0_0 = arith.constant 0 : index
    %0 = vector.load %arg2[%c0, %c0_0] : memref<19x512xf32, #tpu.memory_space<vmem>>, vector<16x512xf32>
    %c16 = arith.constant 16 : index
    %c0_1 = arith.constant 0 : index
    %1 = vector.load %arg2[%c16, %c0_1] : memref<19x512xf32, #tpu.memory_space<vmem>>, vector<1x512xf32>
    %c17 = arith.constant 17 : index
    %c0_2 = arith.constant 0 : index
    %2 = vector.load %arg2[%c17, %c0_2] : memref<19x512xf32, #tpu.memory_space<vmem>>, vector<1x512xf32>
    %c18 = arith.constant 18 : index
    %c0_3 = arith.constant 0 : index
    %3 = vector.load %arg2[%c18, %c0_3] : memref<19x512xf32, #tpu.memory_space<vmem>>, vector<1x512xf32>
    %c0_4 = arith.constant 0 : index
    %c0_5 = arith.constant 0 : index
    %4 = vector.load %arg3[%c0_4, %c0_5] : memref<208x64xf32, #tpu.memory_space<vmem>>, vector<32x16xf32>
    %c0_6 = arith.constant 0 : index
    %c0_7 = arith.constant 0 : index
    %5 = vector.load %arg4[%c0_6, %c0_7] : memref<208x1xf32, #tpu.memory_space<vmem>>, vector<32x1xf32>
    %cst = arith.constant dense<0.000000e+00> : vector<32x512xf32>
    %6 = tpu.matmul %4, %0, %cst {dimension_numbers = #tpu.dot_dimension_numbers<[1], [0], [0], [1], [0, 0, 1, 1], [], []>} : vector<32x16xf32>, vector<16x512xf32>, vector<32x512xf32> -> vector<32x512xf32>
    %7 = vector.broadcast %5 : vector<32x1xf32> to vector<32x512xf32>
    %8 = arith.addf %6, %7 : vector<32x512xf32>
    %cst_8 = arith.constant 0.000000e+00 : f32
    %9 = vector.broadcast %cst_8 : f32 to vector<32x512xf32>
    %10 = arith.cmpf oge, %8, %9 : vector<32x512xf32>
    %cst_9 = arith.constant 0.00999999977 : f32
    %11 = vector.broadcast %cst_9 : f32 to vector<32x512xf32>
    %12 = arith.mulf %11, %8 : vector<32x512xf32>
    %13 = arith.select %10, %8, %12 : vector<32x512xi1>, vector<32x512xf32>
    %c32 = arith.constant 32 : index
    %c0_10 = arith.constant 0 : index
    %14 = vector.load %arg3[%c32, %c0_10] : memref<208x64xf32, #tpu.memory_space<vmem>>, vector<32x32xf32>
    %c32_11 = arith.constant 32 : index
    %c0_12 = arith.constant 0 : index
    %15 = vector.load %arg4[%c32_11, %c0_12] : memref<208x1xf32, #tpu.memory_space<vmem>>, vector<32x1xf32>
    %cst_13 = arith.constant dense<0.000000e+00> : vector<32x512xf32>
    %16 = tpu.matmul %14, %13, %cst_13 {dimension_numbers = #tpu.dot_dimension_numbers<[1], [0], [0], [1], [0, 0, 1, 1], [], []>} : vector<32x32xf32>, vector<32x512xf32>, vector<32x512xf32> -> vector<32x512xf32>
    %17 = vector.broadcast %15 : vector<32x1xf32> to vector<32x512xf32>
    %18 = arith.addf %16, %17 : vector<32x512xf32>
    %cst_14 = arith.constant 0.000000e+00 : f32
    %19 = vector.broadcast %cst_14 : f32 to vector<32x512xf32>
    %20 = arith.cmpf oge, %18, %19 : vector<32x512xf32>
    %cst_15 = arith.constant 0.00999999977 : f32
    %21 = vector.broadcast %cst_15 : f32 to vector<32x512xf32>
    %22 = arith.mulf %21, %18 : vector<32x512xf32>
    %23 = arith.select %20, %18, %22 : vector<32x512xi1>, vector<32x512xf32>
    %c64 = arith.constant 64 : index
    %c0_16 = arith.constant 0 : index
    %24 = vector.load %arg3[%c64, %c0_16] : memref<208x64xf32, #tpu.memory_space<vmem>>, vector<8x32xf32>
    %c64_17 = arith.constant 64 : index
    %c0_18 = arith.constant 0 : index
    %25 = vector.load %arg4[%c64_17, %c0_18] : memref<208x1xf32, #tpu.memory_space<vmem>>, vector<8x1xf32>
    %cst_19 = arith.constant dense<0.000000e+00> : vector<8x512xf32>
    %26 = tpu.matmul %24, %23, %cst_19 {dimension_numbers = #tpu.dot_dimension_numbers<[1], [0], [0], [1], [0, 0, 1, 1], [], []>} : vector<8x32xf32>, vector<32x512xf32>, vector<8x512xf32> -> vector<8x512xf32>
    %27 = vector.broadcast %25 : vector<8x1xf32> to vector<8x512xf32>
    %28 = arith.addf %26, %27 : vector<8x512xf32>
    %29 = tpu.concatenate %28, %1 in 0 : vector<8x512xf32>, vector<1x512xf32> -> vector<9x512xf32>
    %c72 = arith.constant 72 : index
    %c0_20 = arith.constant 0 : index
    %30 = vector.load %arg3[%c72, %c0_20] : memref<208x64xf32, #tpu.memory_space<vmem>>, vector<64x9xf32>
    %c72_21 = arith.constant 72 : index
    %c0_22 = arith.constant 0 : index
    %31 = vector.load %arg4[%c72_21, %c0_22] : memref<208x1xf32, #tpu.memory_space<vmem>>, vector<64x1xf32>
    %cst_23 = arith.constant dense<0.000000e+00> : vector<64x512xf32>
    %32 = tpu.matmul %30, %29, %cst_23 {dimension_numbers = #tpu.dot_dimension_numbers<[1], [0], [0], [1], [0, 0, 1, 1], [], []>} : vector<64x9xf32>, vector<9x512xf32>, vector<64x512xf32> -> vector<64x512xf32>
    %33 = vector.broadcast %31 : vector<64x1xf32> to vector<64x512xf32>
    %34 = arith.addf %32, %33 : vector<64x512xf32>
    %cst_24 = arith.constant 0.000000e+00 : f32
    %35 = vector.broadcast %cst_24 : f32 to vector<64x512xf32>
    %36 = arith.cmpf oge, %34, %35 : vector<64x512xf32>
    %cst_25 = arith.constant 0.00999999977 : f32
    %37 = vector.broadcast %cst_25 : f32 to vector<64x512xf32>
    %38 = arith.mulf %37, %34 : vector<64x512xf32>
    %39 = arith.select %36, %34, %38 : vector<64x512xi1>, vector<64x512xf32>
    %c136 = arith.constant 136 : index
    %c0_26 = arith.constant 0 : index
    %40 = vector.load %arg3[%c136, %c0_26] : memref<208x64xf32, #tpu.memory_space<vmem>>, vector<64x64xf32>
    %c136_27 = arith.constant 136 : index
    %c0_28 = arith.constant 0 : index
    %41 = vector.load %arg4[%c136_27, %c0_28] : memref<208x1xf32, #tpu.memory_space<vmem>>, vector<64x1xf32>
    %cst_29 = arith.constant dense<0.000000e+00> : vector<64x512xf32>
    %42 = tpu.matmul %40, %39, %cst_29 {dimension_numbers = #tpu.dot_dimension_numbers<[1], [0], [0], [1], [0, 0, 1, 1], [], []>} : vector<64x64xf32>, vector<64x512xf32>, vector<64x512xf32> -> vector<64x512xf32>
    %43 = vector.broadcast %41 : vector<64x1xf32> to vector<64x512xf32>
    %44 = arith.addf %42, %43 : vector<64x512xf32>
    %cst_30 = arith.constant 0.000000e+00 : f32
    %45 = vector.broadcast %cst_30 : f32 to vector<64x512xf32>
    %46 = arith.cmpf oge, %44, %45 : vector<64x512xf32>
    %cst_31 = arith.constant 0.00999999977 : f32
    %47 = vector.broadcast %cst_31 : f32 to vector<64x512xf32>
    %48 = arith.mulf %47, %44 : vector<64x512xf32>
    %49 = arith.select %46, %44, %48 : vector<64x512xi1>, vector<64x512xf32>
    %c200 = arith.constant 200 : index
    %c0_32 = arith.constant 0 : index
    %50 = vector.load %arg3[%c200, %c0_32] : memref<208x64xf32, #tpu.memory_space<vmem>>, vector<2x64xf32>
    %c200_33 = arith.constant 200 : index
    %c0_34 = arith.constant 0 : index
    %51 = vector.load %arg4[%c200_33, %c0_34] : memref<208x1xf32, #tpu.memory_space<vmem>>, vector<2x1xf32>
    %cst_35 = arith.constant dense<0.000000e+00> : vector<2x512xf32>
    %52 = tpu.matmul %50, %49, %cst_35 {dimension_numbers = #tpu.dot_dimension_numbers<[1], [0], [0], [1], [0, 0, 1, 1], [], []>} : vector<2x64xf32>, vector<64x512xf32>, vector<2x512xf32> -> vector<2x512xf32>
    %53 = vector.broadcast %51 : vector<2x1xf32> to vector<2x512xf32>
    %54 = arith.addf %52, %53 : vector<2x512xf32>
    %55 = vector.extract_strided_slice %54 {offsets = [0, 0], sizes = [1, 512], strides = [1, 1]} : vector<2x512xf32> to vector<1x512xf32>
    %56 = vector.extract_strided_slice %54 {offsets = [1, 0], sizes = [1, 512], strides = [1, 1]} : vector<2x512xf32> to vector<1x512xf32>
    %cst_36 = arith.constant 0.000000e+00 : f32
    %57 = vector.broadcast %cst_36 : f32 to vector<1x512xf32>
    %58 = arith.subf %57, %55 : vector<1x512xf32>
    %59 = math.exp %58 : vector<1x512xf32>
    %cst_37 = arith.constant 1.000000e+00 : f32
    %60 = vector.broadcast %cst_37 : f32 to vector<1x512xf32>
    %61 = arith.addf %60, %59 : vector<1x512xf32>
    %62 = tpu.reciprocal %61 {approx = true} : vector<1x512xf32> -> vector<1x512xf32>
    %cst_38 = arith.constant 0.000000e+00 : f32
    %63 = vector.broadcast %cst_38 : f32 to vector<1x512xf32>
    %64 = arith.subf %63, %56 : vector<1x512xf32>
    %65 = math.exp %64 : vector<1x512xf32>
    %cst_39 = arith.constant 1.000000e+00 : f32
    %66 = vector.broadcast %cst_39 : f32 to vector<1x512xf32>
    %67 = arith.addf %66, %65 : vector<1x512xf32>
    %68 = tpu.reciprocal %67 {approx = true} : vector<1x512xf32> -> vector<1x512xf32>
    %cst_40 = arith.constant 1.000000e+00 : f32
    %69 = vector.broadcast %cst_40 : f32 to vector<1x512xf32>
    %70 = arith.subf %69, %1 : vector<1x512xf32>
    %71 = arith.mulf %70, %55 : vector<1x512xf32>
    %cst_41 = arith.constant 1.000000e+00 : f32
    %72 = vector.broadcast %cst_41 : f32 to vector<1x512xf32>
    %73 = arith.addf %72, %59 : vector<1x512xf32>
    %74 = math.log %73 : vector<1x512xf32>
    %75 = arith.addf %71, %74 : vector<1x512xf32>
    %c0_42 = arith.constant 0 : index
    %c0_43 = arith.constant 0 : index
    %76 = memref.load %arg1[%c0_42, %c0_43] : memref<2x2xf32, #tpu.memory_space<smem>>
    %c0_44 = arith.constant 0 : index
    %c1 = arith.constant 1 : index
    %77 = memref.load %arg1[%c0_44, %c1] : memref<2x2xf32, #tpu.memory_space<smem>>
    %c1_45 = arith.constant 1 : index
    %c0_46 = arith.constant 0 : index
    %78 = memref.load %arg1[%c1_45, %c0_46] : memref<2x2xf32, #tpu.memory_space<smem>>
    %c1_47 = arith.constant 1 : index
    %c1_48 = arith.constant 1 : index
    %79 = memref.load %arg1[%c1_47, %c1_48] : memref<2x2xf32, #tpu.memory_space<smem>>
    %cst_49 = arith.constant 1.000000e+00 : f32
    %80 = vector.broadcast %cst_49 : f32 to vector<1x512xf32>
    %81 = arith.subf %80, %2 : vector<1x512xf32>
    %82 = vector.broadcast %76 : f32 to vector<1x512xf32>
    %83 = arith.mulf %82, %81 : vector<1x512xf32>
    %cst_50 = arith.constant 1.000000e+00 : f32
    %84 = vector.broadcast %cst_50 : f32 to vector<1x512xf32>
    %85 = arith.subf %84, %1 : vector<1x512xf32>
    %86 = arith.mulf %83, %85 : vector<1x512xf32>
    %cst_51 = arith.constant 1.000000e+00 : f32
    %87 = vector.broadcast %cst_51 : f32 to vector<1x512xf32>
    %88 = arith.subf %87, %2 : vector<1x512xf32>
    %89 = vector.broadcast %77 : f32 to vector<1x512xf32>
    %90 = arith.mulf %89, %88 : vector<1x512xf32>
    %91 = arith.mulf %90, %1 : vector<1x512xf32>
    %92 = arith.addf %86, %91 : vector<1x512xf32>
    %93 = vector.broadcast %78 : f32 to vector<1x512xf32>
    %94 = arith.mulf %93, %2 : vector<1x512xf32>
    %cst_52 = arith.constant 1.000000e+00 : f32
    %95 = vector.broadcast %cst_52 : f32 to vector<1x512xf32>
    %96 = arith.subf %95, %1 : vector<1x512xf32>
    %97 = arith.mulf %94, %96 : vector<1x512xf32>
    %98 = arith.addf %92, %97 : vector<1x512xf32>
    %99 = vector.broadcast %79 : f32 to vector<1x512xf32>
    %100 = arith.mulf %99, %2 : vector<1x512xf32>
    %101 = arith.mulf %100, %1 : vector<1x512xf32>
    %102 = arith.addf %98, %101 : vector<1x512xf32>
    %103 = arith.subf %2, %68 : vector<1x512xf32>
    %104 = math.absf %103 : vector<1x512xf32>
    %cst_53 = arith.constant -1.000000e+00 : f32
    %105 = vector.broadcast %cst_53 : f32 to vector<1x512xf32>
    %106 = arith.mulf %105, %104 : vector<1x512xf32>
    %cst_54 = arith.constant 1.000000e+00 : f32
    %107 = vector.broadcast %cst_54 : f32 to vector<1x512xf32>
    %108 = arith.mulf %107, %75 : vector<1x512xf32>
    %109 = arith.mulf %106, %102 : vector<1x512xf32>
    %cst_55 = arith.constant 0.00333333341 : f32
    %110 = vector.broadcast %cst_55 : f32 to vector<1x512xf32>
    %111 = arith.mulf %109, %110 : vector<1x512xf32>
    %112 = arith.addf %108, %111 : vector<1x512xf32>
    %113 = arith.mulf %3, %112 : vector<1x512xf32>
    %c0_56 = arith.constant 0 : index
    %c0_57 = arith.constant 0 : index
    %c0_58 = arith.constant 0 : index
    %114 = vector.load %arg5[%c0_56, %c0_57, %c0_58] : memref<1x2x512xf32, #tpu.memory_space<vmem>>, vector<1x1x512xf32>
    %115 = vector.shape_cast %114 : vector<1x1x512xf32> to vector<1x512xf32>
    %116 = vector.shape_cast %62 : vector<1x512xf32> to vector<1x1x512xf32>
    tpu.vector_store %arg5[%c0_56, %c0_57, %c0_58], %116 {strides = array<i32>} : memref<1x2x512xf32, #tpu.memory_space<vmem>>, vector<1x1x512xf32>,
    %c0_59 = arith.constant 0 : index
    %c1_60 = arith.constant 1 : index
    %c0_61 = arith.constant 0 : index
    %117 = vector.load %arg5[%c0_59, %c1_60, %c0_61] : memref<1x2x512xf32, #tpu.memory_space<vmem>>, vector<1x1x512xf32>
    %118 = vector.shape_cast %117 : vector<1x1x512xf32> to vector<1x512xf32>
    %119 = vector.shape_cast %113 : vector<1x512xf32> to vector<1x1x512xf32>
    tpu.vector_store %arg5[%c0_59, %c1_60, %c0_61], %119 {strides = array<i32>} : memref<1x2x512xf32, #tpu.memory_space<vmem>>, vector<1x1x512xf32>,
    return
  }
  func.func @transform_0(%arg0: i32) -> (i32, i32) {
    %c0_i32 = arith.constant 0 : i32
    %c0_i32_0 = arith.constant 0 : i32
    %c0_i32_1 = arith.constant 0 : i32
    return %c0_i32, %c0_i32_0 : i32, i32
  }
  func.func @transform_1(%arg0: i32) -> (i32, i32) {
    %c0_i32 = arith.constant 0 : i32
    %c0_i32_0 = arith.constant 0 : i32
    return %c0_i32, %arg0 : i32, i32
  }
  func.func @transform_2(%arg0: i32) -> (i32, i32) {
    %c0_i32 = arith.constant 0 : i32
    %c0_i32_0 = arith.constant 0 : i32
    %c0_i32_1 = arith.constant 0 : i32
    return %c0_i32, %c0_i32_0 : i32, i32
  }
  func.func @transform_3(%arg0: i32) -> (i32, i32) {
    %c0_i32 = arith.constant 0 : i32
    %c0_i32_0 = arith.constant 0 : i32
    %c0_i32_1 = arith.constant 0 : i32
    return %c0_i32, %c0_i32_0 : i32, i32
  }
  func.func @transform_4(%arg0: i32) -> (i32, i32, i32) {
    %c0_i32 = arith.constant 0 : i32
    %c0_i32_0 = arith.constant 0 : i32
    %c0_i32_1 = arith.constant 0 : i32
    return %arg0, %c0_i32, %c0_i32_0 : i32, i32, i32
  }
}

</mosaic_0001>

<llo_original>
// kernel: tpu_custom_call.1
$region0: #{tpu_custom_call.1}
  #allocation0 [shape = 'u32[]', space=smem, size = 0x4, offset = 0x4, fixed_abs, tag = 'smem constant byte address 0x4 - core index']
  #allocation1 [shape = 'u32[144,128]{1,0:T(1,128)}', space=vmem, size = 0x12000, scoped, tag = 'internal scratch']
  %s0 = inlined_call_operand.vmem [shape: f32[2,2], index: 0, kind: input, shape index: {}]
  %s1 = inlined_call_operand.vmem [shape: f32[19,512], index: 1, kind: input, shape index: {}]
  %s2 = inlined_call_operand.vmem [shape: f32[208,64], index: 2, kind: input, shape index: {}]
  %s3 = inlined_call_operand.vmem [shape: f32[208,1], index: 3, kind: input, shape index: {}]
  %s4 = inlined_call_operand.hbm [shape: f32[1,2,512], index: 4, kind: output, shape index: {}]
  %s5 = sld [smem:[#allocation0]]
  $region30: #{tpu_custom_call.1} parent=0
    _
  %s7 = ssub.s32 1, %s5
  %s8 = scalar_select 0, %s7, %s5
  $region1: #{tpu_custom_call.1} parent=0
    #allocation2 [shape = 'u8[1024]{0}', space=smem, size = 0x400, scoped, tag = 'input window, operand 0, single buffered']
    #allocation3 [shape = 's32[1]{0}', space=sflag, size = 0x4, scoped, tag = 'scoped memory for tpu_custom_call.1']
    #allocation4 [shape = 's32[1]{0}', space=sflag, size = 0x4, scoped, tag = 'scoped memory for tpu_custom_call.1']
    #allocation5 [shape = 'u8[4096]{0}', space=vmem, size = 0x1000, scoped, tag = 'output window, operand 0, single buffered']
    %9 = vsyncpa [#allocation4], 0
    %10 = vsyncpa [#allocation3], 0
    // Predicated region
    $region2: #{tpu_custom_call.1} parent=1 // pred_check
      _
    $region3: #{tpu_custom_call.1} parent=1 // pred_check_branch
      %12 = sbr.rel (0) target = $region5
    $region4: #{tpu_custom_call.1} parent=1 // pred_region
      %s14 = ssub.s32 32, 32
      %15 = vsyncadd [#allocation4], %s14
      %s17 = sshll.u32 %s0, 4
      %s18 = int_to_ptr.vmem [resolvable:$true] %s17
      %20 = dma.vmem_to_smem %s18, 32, [#allocation2], [#allocation4]
    $region5: #{tpu_custom_call.1} parent=1 // pred_fallthru
      _
    // Predicated region
    $region6: #{tpu_custom_call.1} parent=1 // pred_check
      _
    $region7: #{tpu_custom_call.1} parent=1 // pred_check_branch
      %22 = sbr.rel (0) target = $region9
    $region8: #{tpu_custom_call.1} parent=1 // pred_region
      _
    $region9: #{tpu_custom_call.1} parent=1 // pred_fallthru
      _
    // Predicated region
    $region10: #{tpu_custom_call.1} parent=1 // pred_check
      _
    $region11: #{tpu_custom_call.1} parent=1 // pred_check_branch
      %24 = sbr.rel (0) target = $region13
    $region12: #{tpu_custom_call.1} parent=1 // pred_region
      _
    $region13: #{tpu_custom_call.1} parent=1 // pred_fallthru
      _
    // Predicated region
    $region14: #{tpu_custom_call.1} parent=1 // pred_check
      _
    $region15: #{tpu_custom_call.1} parent=1 // pred_check_branch
      %26 = sbr.rel (0) target = $region17
    $region16: #{tpu_custom_call.1} parent=1 // pred_region
      _
    $region17: #{tpu_custom_call.1} parent=1 // pred_fallthru
      _
    // Predicated region
    $region18: #{tpu_custom_call.1} parent=1 // pred_check
      _
    $region19: #{tpu_custom_call.1} parent=1 // pred_check_branch
      %28 = sbr.rel (0) target = $region21
    $region20: #{tpu_custom_call.1} parent=1 // pred_region
      %29 = dma.done [#allocation4], 32
    $region21: #{tpu_custom_call.1} parent=1 // pred_fallthru
      _
    %30 = sfence
    %v31 = vld [vmem:[%s1] sm:$0xff]
    %v32 = vld [vmem:[%s1 + $0x8] sm:$0xff]
    %v33 = vld [vmem:[%s1 + $0x10] sm:$0xff]
    %v34 = vld [vmem:[%s1 + $0x18] sm:$0xff]
    %v35 = vld [vmem:[%s1 + $0x20] sm:$0xff]
    %v36 = vld [vmem:[%s1 + $0x28] sm:$0xff]
    %v37 = vld [vmem:[%s1 + $0x30] sm:$0xff]
    %v38 = vld [vmem:[%s1 + $0x38] sm:$0xff]
    %s39 = scalar_lea.vmem %s1, 64
    %v40 = vld [vmem:[%s39] ss:$8 sm:$0xf]
    %s41 = scalar_lea.vmem %s1, 65
    %v42 = vld [vmem:[%s41] ss:$8 sm:$0xf]
    %s43 = scalar_lea.vmem %s1, 66
    %v44 = vld [vmem:[%s43] ss:$8 sm:$0xf]
    %v45 = vld [vmem:[%s2] sm:$0xff]
    %v46 = vld [vmem:[%s2 + $0x8] sm:$0xff]
    %v47 = vld [vmem:[%s2 + $0x10] sm:$0xff]
    %v48 = vld [vmem:[%s2 + $0x18] sm:$0xff]
    %v49 = vld [vmem:[%s3] sm:$0xff]
    %v50 = vld [vmem:[%s3 + $0x8] sm:$0xff]
    %v51 = vld [vmem:[%s3 + $0x10] sm:$0xff]
    %v52 = vld [vmem:[%s3 + $0x18] sm:$0xff]
    %54 = vset.pattern.permute.xlu0 0
    %55 = vperm.xlu0 %54, %v49
    %v56 = vpop.permute.xlu0 %55
    %59 = vset.pattern.permute.xlu0 0
    %60 = vperm.xlu0 %59, %v50
    %v61 = vpop.permute.xlu0 %60
    %64 = vset.pattern.permute.xlu0 0
    %65 = vperm.xlu0 %64, %v51
    %v66 = vpop.permute.xlu0 %65
    %69 = vset.pattern.permute.xlu0 0
    %70 = vperm.xlu0 %69, %v52
    %v71 = vpop.permute.xlu0 %70
    %vm73 = vcmask 130048
    %v75 = vsel %vm73, %v45, 0
    %v78 = vsel %vm73, %v46, 0
    %v81 = vsel %vm73, %v47, 0
    %v84 = vsel %vm73, %v48, 0
    %86 = vmatprep.subr.mxu0 0.0
    %87 = vmatpush1.msra.mxu0 0.0
    %88 = vmatprep.subr.mxu0 0.0
    %89 = vmatpush1.msra.mxu0 0.0
    %90 = vmatprep.subr.mxu0 0.0
    %91 = vmatpush1.msra.mxu0 0.0
    %92 = vmatprep.subr.mxu0 0.0
    %93 = vmatpush1.msra.mxu0 0.0
    %94 = vmatprep.subr.mxu0 0.0
    %95 = vmatpush1.msra.mxu0 0.0
    %96 = vmatprep.subr.mxu0 0.0
    %97 = vmatpush1.msra.mxu0 0.0
    %98 = vmatprep.subr.mxu0 0.0
    %99 = vmatpush1.msra.mxu0 0.0
    %100 = vmatprep.subr.mxu0 0.0
    %101 = vmatpush1.msra.mxu0 0.0
    %102 = vmatprep.subr.mxu0 0.0
    %103 = vmatpush1.msra.mxu0 0.0
    %104 = vmatprep.subr.mxu0 0.0
    %105 = vmatpush1.msra.mxu0 0.0
    %106 = vmatprep.subr.mxu0 0.0
    %107 = vmatpush1.msra.mxu0 0.0
    %108 = vmatprep.subr.mxu0 0.0
    %109 = vmatpush1.msra.mxu0 0.0
    %110 = vmatprep.subr.mxu0 0.0
    %111 = vmatpush1.msra.mxu0 0.0
    %112 = vmatprep.subr.mxu0 0.0
    %113 = vmatpush1.msra.mxu0 0.0
    %114 = vmatprep.subr.mxu0 %v36
    %115 = vmatpush1.msra.mxu0 %v35
    %116 = vmatprep.subr.mxu0 %v32
    %117 = vmatpush1.msra.mxu0 %v31
    %118 = vmatprep.subr.mxu0 0.0
    %119 = vmatpush2.msra.mxu0 0.0
    %120 = vmatprep.subr.mxu0 0.0
    %121 = vmatpush2.msra.mxu0 0.0
    %122 = vmatprep.subr.mxu0 0.0
    %123 = vmatpush2.msra.mxu0 0.0
    %124 = vmatprep.subr.mxu0 0.0
    %125 = vmatpush2.msra.mxu0 0.0
    %126 = vmatprep.subr.mxu0 0.0
    %127 = vmatpush2.msra.mxu0 0.0
    %128 = vmatprep.subr.mxu0 0.0
    %129 = vmatpush2.msra.mxu0 0.0
    %130 = vmatprep.subr.mxu0 0.0
    %131 = vmatpush2.msra.mxu0 0.0
    %132 = vmatprep.subr.mxu0 0.0
    %133 = vmatpush2.msra.mxu0 0.0
    %134 = vmatprep.subr.mxu0 0.0
    %135 = vmatpush2.msra.mxu0 0.0
    %136 = vmatprep.subr.mxu0 0.0
    %137 = vmatpush2.msra.mxu0 0.0
    %138 = vmatprep.subr.mxu0 0.0
    %139 = vmatpush2.msra.mxu0 0.0
    %140 = vmatprep.subr.mxu0 0.0
    %141 = vmatpush2.msra.mxu0 0.0
    %142 = vmatprep.subr.mxu0 0.0
    %143 = vmatpush2.msra.mxu0 0.0
    %144 = vmatprep.subr.mxu0 0.0
    %145 = vmatpush2.msra.mxu0 0.0
    %146 = vmatprep.subr.mxu0 0.0
    %147 = vmatpush2.msra.mxu0 0.0
    %148 = vmatprep.subr.mxu0 0.0
    %149 = vmatpush2.msra.mxu0 0.0
    %150 = vmatprep.mubr.f32.mxu0 0.0
    %151 = vmatmul.mubr.f32.gmra.mxu0 %v75
    %v152 = vpop.f32.mrf.mxu0
    %v153 = vadd.f32 %v56, %v152
    %v154 = vpop.f32.mrf.mxu0
    %v155 = vadd.f32 %v56, %v154
    %156 = vmatprep.mubr.f32.mxu0 0.0
    %157 = vmatmul.mubr.f32.gmra.mxu0 %v78
    %v158 = vpop.f32.mrf.mxu0
    %v159 = vadd.f32 %v61, %v158
    %v160 = vpop.f32.mrf.mxu0
    %v161 = vadd.f32 %v61, %v160
    %162 = vmatprep.mubr.f32.mxu0 0.0
    %163 = vmatmul.mubr.f32.gmra.mxu0 %v81
    %v164 = vpop.f32.mrf.mxu0
    %v165 = vadd.f32 %v66, %v164
    %v166 = vpop.f32.mrf.mxu0
    %v167 = vadd.f32 %v66, %v166
    %168 = vmatprep.mubr.f32.mxu0 0.0
    %169 = vmatmul.mubr.f32.gmra.mxu0 %v84
    %v170 = vpop.f32.mrf.mxu0
    %v171 = vadd.f32 %v71, %v170
    %v172 = vpop.f32.mrf.mxu0
    %v173 = vadd.f32 %v71, %v172
    %174 = vdwg.mxu0
    %175 = vmatprep.subr.mxu0 0.0
    %176 = vmatpush1.msra.mxu0 0.0
    %177 = vmatprep.subr.mxu0 0.0
    %178 = vmatpush1.msra.mxu0 0.0
    %179 = vmatprep.subr.mxu0 0.0
    %180 = vmatpush1.msra.mxu0 0.0
    %181 = vmatprep.subr.mxu0 0.0
    %182 = vmatpush1.msra.mxu0 0.0
    %183 = vmatprep.subr.mxu0 0.0
    %184 = vmatpush1.msra.mxu0 0.0
    %185 = vmatprep.subr.mxu0 0.0
    %186 = vmatpush1.msra.mxu0 0.0
    %187 = vmatprep.subr.mxu0 0.0
    %188 = vmatpush1.msra.mxu0 0.0
    %189 = vmatprep.subr.mxu0 0.0
    %190 = vmatpush1.msra.mxu0 0.0
    %191 = vmatprep.subr.mxu0 0.0
    %192 = vmatpush1.msra.mxu0 0.0
    %193 = vmatprep.subr.mxu0 0.0
    %194 = vmatpush1.msra.mxu0 0.0
    %195 = vmatprep.subr.mxu0 0.0
    %196 = vmatpush1.msra.mxu0 0.0
    %197 = vmatprep.subr.mxu0 0.0
    %198 = vmatpush1.msra.mxu0 0.0
    %199 = vmatprep.subr.mxu0 0.0
    %200 = vmatpush1.msra.mxu0 0.0
    %201 = vmatprep.subr.mxu0 0.0
    %202 = vmatpush1.msra.mxu0 0.0
    %203 = vmatprep.subr.mxu0 %v38
    %204 = vmatpush1.msra.mxu0 %v37
    %205 = vmatprep.subr.mxu0 %v34
    %206 = vmatpush1.msra.mxu0 %v33
    %207 = vmatprep.subr.mxu0 0.0
    %208 = vmatpush2.msra.mxu0 0.0
    %209 = vmatprep.subr.mxu0 0.0
    %210 = vmatpush2.msra.mxu0 0.0
    %211 = vmatprep.subr.mxu0 0.0
    %212 = vmatpush2.msra.mxu0 0.0
    %213 = vmatprep.subr.mxu0 0.0
    %214 = vmatpush2.msra.mxu0 0.0
    %215 = vmatprep.subr.mxu0 0.0
    %216 = vmatpush2.msra.mxu0 0.0
    %217 = vmatprep.subr.mxu0 0.0
    %218 = vmatpush2.msra.mxu0 0.0
    %219 = vmatprep.subr.mxu0 0.0
    %220 = vmatpush2.msra.mxu0 0.0
    %221 = vmatprep.subr.mxu0 0.0
    %222 = vmatpush2.msra.mxu0 0.0
    %223 = vmatprep.subr.mxu0 0.0
    %224 = vmatpush2.msra.mxu0 0.0
    %225 = vmatprep.subr.mxu0 0.0
    %226 = vmatpush2.msra.mxu0 0.0
    %227 = vmatprep.subr.mxu0 0.0
    %228 = vmatpush2.msra.mxu0 0.0
    %229 = vmatprep.subr.mxu0 0.0
    %230 = vmatpush2.msra.mxu0 0.0
    %231 = vmatprep.subr.mxu0 0.0
    %232 = vmatpush2.msra.mxu0 0.0
    %233 = vmatprep.subr.mxu0 0.0
    %234 = vmatpush2.msra.mxu0 0.0
    %235 = vmatprep.subr.mxu0 0.0
    %236 = vmatpush2.msra.mxu0 0.0
    %237 = vmatprep.subr.mxu0 0.0
    %238 = vmatpush2.msra.mxu0 0.0
    %239 = vmatprep.mubr.f32.mxu0 0.0
    %240 = vmatmul.mubr.f32.gmra.mxu0 %v75
    %v241 = vpop.f32.mrf.mxu0
    %v242 = vadd.f32 %v56, %v241
    %v243 = vpop.f32.mrf.mxu0
    %v244 = vadd.f32 %v56, %v243
    %245 = vmatprep.mubr.f32.mxu0 0.0
    %246 = vmatmul.mubr.f32.gmra.mxu0 %v78
    %v247 = vpop.f32.mrf.mxu0
    %v248 = vadd.f32 %v61, %v247
    %v249 = vpop.f32.mrf.mxu0
    %v250 = vadd.f32 %v61, %v249
    %251 = vmatprep.mubr.f32.mxu0 0.0
    %252 = vmatmul.mubr.f32.gmra.mxu0 %v81
    %v253 = vpop.f32.mrf.mxu0
    %v254 = vadd.f32 %v66, %v253
    %v255 = vpop.f32.mrf.mxu0
    %v256 = vadd.f32 %v66, %v255
    %257 = vmatprep.mubr.f32.mxu0 0.0
    %258 = vmatmul.mubr.f32.gmra.mxu0 %v84
    %v259 = vpop.f32.mrf.mxu0
    %v260 = vadd.f32 %v71, %v259
    %v261 = vpop.f32.mrf.mxu0
    %v262 = vadd.f32 %v71, %v261
    %263 = vdwg.mxu0
    %vm264 = vcmp.ge.f32.partialorder %v153, 0.0
    %vm265 = vcmp.ge.f32.partialorder %v155, 0.0
    %vm266 = vcmp.ge.f32.partialorder %v242, 0.0
    %vm267 = vcmp.ge.f32.partialorder %v244, 0.0
    %vm268 = vcmp.ge.f32.partialorder %v159, 0.0
    %vm269 = vcmp.ge.f32.partialorder %v161, 0.0
    %vm270 = vcmp.ge.f32.partialorder %v248, 0.0
    %vm271 = vcmp.ge.f32.partialorder %v250, 0.0
    %vm272 = vcmp.ge.f32.partialorder %v165, 0.0
    %vm273 = vcmp.ge.f32.partialorder %v167, 0.0
    %vm274 = vcmp.ge.f32.partialorder %v254, 0.0
    %vm275 = vcmp.ge.f32.partialorder %v256, 0.0
    %vm276 = vcmp.ge.f32.partialorder %v171, 0.0
    %vm277 = vcmp.ge.f32.partialorder %v173, 0.0
    %vm278 = vcmp.ge.f32.partialorder %v260, 0.0
    %vm279 = vcmp.ge.f32.partialorder %v262, 0.0
    %v280 = vmul.f32 %v153, 0.01
    %v281 = vmul.f32 %v155, 0.01
    %v282 = vmul.f32 %v242, 0.01
    %v283 = vmul.f32 %v244, 0.01
    %v284 = vmul.f32 %v159, 0.01
    %v285 = vmul.f32 %v161, 0.01
    %v286 = vmul.f32 %v248, 0.01
    %v287 = vmul.f32 %v250, 0.01
    %v288 = vmul.f32 %v165, 0.01
    %v289 = vmul.f32 %v167, 0.01
    %v290 = vmul.f32 %v254, 0.01
    %v291 = vmul.f32 %v256, 0.01
    %v292 = vmul.f32 %v171, 0.01
    %v293 = vmul.f32 %v173, 0.01
    %v294 = vmul.f32 %v260, 0.01
    %v295 = vmul.f32 %v262, 0.01
    %v296 = vsel %vm264, %v153, %v280
    %v297 = vsel %vm265, %v155, %v281
    %v298 = vsel %vm266, %v242, %v282
    %v299 = vsel %vm267, %v244, %v283
    %v300 = vsel %vm268, %v159, %v284
    %v301 = vsel %vm269, %v161, %v285
    %v302 = vsel %vm270, %v248, %v286
    %v303 = vsel %vm271, %v250, %v287
    %v304 = vsel %vm272, %v165, %v288
    %v305 = vsel %vm273, %v167, %v289
    %v306 = vsel %vm274, %v254, %v290
    %v307 = vsel %vm275, %v256, %v291
    %v308 = vsel %vm276, %v171, %v292
    %v309 = vsel %vm277, %v173, %v293
    %v310 = vsel %vm278, %v260, %v294
    %v311 = vsel %vm279, %v262, %v295
    %v312 = vld [vmem:[%s2 + $0x20] sm:$0xff]
    %v313 = vld [vmem:[%s2 + $0x28] sm:$0xff]
    %v314 = vld [vmem:[%s2 + $0x30] sm:$0xff]
    %v315 = vld [vmem:[%s2 + $0x38] sm:$0xff]
    %v316 = vld [vmem:[%s3 + $0x20] sm:$0xff]
    %v317 = vld [vmem:[%s3 + $0x28] sm:$0xff]
    %v318 = vld [vmem:[%s3 + $0x30] sm:$0xff]
    %v319 = vld [vmem:[%s3 + $0x38] sm:$0xff]
    %321 = vset.pattern.permute.xlu0 0
    %322 = vperm.xlu0 %321, %v316
    %v323 = vpop.permute.xlu0 %322
    %326 = vset.pattern.permute.xlu0 0
    %327 = vperm.xlu0 %326, %v317
    %v328 = vpop.permute.xlu0 %327
    %331 = vset.pattern.permute.xlu0 0
    %332 = vperm.xlu0 %331, %v318
    %v333 = vpop.permute.xlu0 %332
    %336 = vset.pattern.permute.xlu0 0
    %337 = vperm.xlu0 %336, %v319
    %v338 = vpop.permute.xlu0 %337
    %vm340 = vcmask 261120
    %v342 = vsel %vm340, %v312, 0
    %v345 = vsel %vm340, %v313, 0
    %v348 = vsel %vm340, %v314, 0
    %v351 = vsel %vm340, %v315, 0
    %353 = vmatprep.subr.mxu0 0.0
    %354 = vmatpush1.msra.mxu0 0.0
    %355 = vmatprep.subr.mxu0 0.0
    %356 = vmatpush1.msra.mxu0 0.0
    %357 = vmatprep.subr.mxu0 0.0
    %358 = vmatpush1.msra.mxu0 0.0
    %359 = vmatprep.subr.mxu0 0.0
    %360 = vmatpush1.msra.mxu0 0.0
    %361 = vmatprep.subr.mxu0 0.0
    %362 = vmatpush1.msra.mxu0 0.0
    %363 = vmatprep.subr.mxu0 0.0
    %364 = vmatpush1.msra.mxu0 0.0
    %365 = vmatprep.subr.mxu0 0.0
    %366 = vmatpush1.msra.mxu0 0.0
    %367 = vmatprep.subr.mxu0 0.0
    %368 = vmatpush1.msra.mxu0 0.0
    %369 = vmatprep.subr.mxu0 0.0
    %370 = vmatpush1.msra.mxu0 0.0
    %371 = vmatprep.subr.mxu0 0.0
    %372 = vmatpush1.msra.mxu0 0.0
    %373 = vmatprep.subr.mxu0 0.0
    %374 = vmatpush1.msra.mxu0 0.0
    %375 = vmatprep.subr.mxu0 0.0
    %376 = vmatpush1.msra.mxu0 0.0
    %377 = vmatprep.subr.mxu0 %v309
    %378 = vmatpush1.msra.mxu0 %v308
    %379 = vmatprep.subr.mxu0 %v305
    %380 = vmatpush1.msra.mxu0 %v304
    %381 = vmatprep.subr.mxu0 %v301
    %382 = vmatpush1.msra.mxu0 %v300
    %383 = vmatprep.subr.mxu0 %v297
    %384 = vmatpush1.msra.mxu0 %v296
    %385 = vmatprep.subr.mxu0 0.0
    %386 = vmatpush2.msra.mxu0 0.0
    %387 = vmatprep.subr.mxu0 0.0
    %388 = vmatpush2.msra.mxu0 0.0
    %389 = vmatprep.subr.mxu0 0.0
    %390 = vmatpush2.msra.mxu0 0.0
    %391 = vmatprep.subr.mxu0 0.0
    %392 = vmatpush2.msra.mxu0 0.0
    %393 = vmatprep.subr.mxu0 0.0
    %394 = vmatpush2.msra.mxu0 0.0
    %395 = vmatprep.subr.mxu0 0.0
    %396 = vmatpush2.msra.mxu0 0.0
    %397 = vmatprep.subr.mxu0 0.0
    %398 = vmatpush2.msra.mxu0 0.0
    %399 = vmatprep.subr.mxu0 0.0
    %400 = vmatpush2.msra.mxu0 0.0
    %401 = vmatprep.subr.mxu0 0.0
    %402 = vmatpush2.msra.mxu0 0.0
    %403 = vmatprep.subr.mxu0 0.0
    %404 = vmatpush2.msra.mxu0 0.0
    %405 = vmatprep.subr.mxu0 0.0
    %406 = vmatpush2.msra.mxu0 0.0
    %407 = vmatprep.subr.mxu0 0.0
    %408 = vmatpush2.msra.mxu0 0.0
    %409 = vmatprep.subr.mxu0 0.0
    %410 = vmatpush2.msra.mxu0 0.0
    %411 = vmatprep.subr.mxu0 0.0
    %412 = vmatpush2.msra.mxu0 0.0
    %413 = vmatprep.subr.mxu0 0.0
    %414 = vmatpush2.msra.mxu0 0.0
    %415 = vmatprep.subr.mxu0 0.0
    %416 = vmatpush2.msra.mxu0 0.0
    %417 = vmatprep.mubr.f32.mxu0 0.0
    %418 = vmatmul.mubr.f32.gmra.mxu0 %v342
    %v419 = vpop.f32.mrf.mxu0
    %v420 = vadd.f32 %v323, %v419
    %v421 = vpop.f32.mrf.mxu0
    %v422 = vadd.f32 %v323, %v421
    %423 = vmatprep.mubr.f32.mxu0 0.0
    %424 = vmatmul.mubr.f32.gmra.mxu0 %v345
    %v425 = vpop.f32.mrf.mxu0
    %v426 = vadd.f32 %v328, %v425
    %v427 = vpop.f32.mrf.mxu0
    %v428 = vadd.f32 %v328, %v427
    %429 = vmatprep.mubr.f32.mxu0 0.0
    %430 = vmatmul.mubr.f32.gmra.mxu0 %v348
    %v431 = vpop.f32.mrf.mxu0
    %v432 = vadd.f32 %v333, %v431
    %v433 = vpop.f32.mrf.mxu0
    %v434 = vadd.f32 %v333, %v433
    %435 = vmatprep.mubr.f32.mxu0 0.0
    %436 = vmatmul.mubr.f32.gmra.mxu0 %v351
    %v437 = vpop.f32.mrf.mxu0
    %v438 = vadd.f32 %v338, %v437
    %v439 = vpop.f32.mrf.mxu0
    %v440 = vadd.f32 %v338, %v439
    %441 = vdwg.mxu0
    %442 = vmatprep.subr.mxu0 0.0
    %443 = vmatpush1.msra.mxu0 0.0
    %444 = vmatprep.subr.mxu0 0.0
    %445 = vmatpush1.msra.mxu0 0.0
    %446 = vmatprep.subr.mxu0 0.0
    %447 = vmatpush1.msra.mxu0 0.0
    %448 = vmatprep.subr.mxu0 0.0
    %449 = vmatpush1.msra.mxu0 0.0
    %450 = vmatprep.subr.mxu0 0.0
    %451 = vmatpush1.msra.mxu0 0.0
    %452 = vmatprep.subr.mxu0 0.0
    %453 = vmatpush1.msra.mxu0 0.0
    %454 = vmatprep.subr.mxu0 0.0
    %455 = vmatpush1.msra.mxu0 0.0
    %456 = vmatprep.subr.mxu0 0.0
    %457 = vmatpush1.msra.mxu0 0.0
    %458 = vmatprep.subr.mxu0 0.0
    %459 = vmatpush1.msra.mxu0 0.0
    %460 = vmatprep.subr.mxu0 0.0
    %461 = vmatpush1.msra.mxu0 0.0
    %462 = vmatprep.subr.mxu0 0.0
    %463 = vmatpush1.msra.mxu0 0.0
    %464 = vmatprep.subr.mxu0 0.0
    %465 = vmatpush1.msra.mxu0 0.0
    %466 = vmatprep.subr.mxu0 %v311
    %467 = vmatpush1.msra.mxu0 %v310
    %468 = vmatprep.subr.mxu0 %v307
    %469 = vmatpush1.msra.mxu0 %v306
    %470 = vmatprep.subr.mxu0 %v303
    %471 = vmatpush1.msra.mxu0 %v302
    %472 = vmatprep.subr.mxu0 %v299
    %473 = vmatpush1.msra.mxu0 %v298
    %474 = vmatprep.subr.mxu0 0.0
    %475 = vmatpush2.msra.mxu0 0.0
    %476 = vmatprep.subr.mxu0 0.0
    %477 = vmatpush2.msra.mxu0 0.0
    %478 = vmatprep.subr.mxu0 0.0
    %479 = vmatpush2.msra.mxu0 0.0
    %480 = vmatprep.subr.mxu0 0.0
    %481 = vmatpush2.msra.mxu0 0.0
    %482 = vmatprep.subr.mxu0 0.0
    %483 = vmatpush2.msra.mxu0 0.0
    %484 = vmatprep.subr.mxu0 0.0
    %485 = vmatpush2.msra.mxu0 0.0
    %486 = vmatprep.subr.mxu0 0.0
    %487 = vmatpush2.msra.mxu0 0.0
    %488 = vmatprep.subr.mxu0 0.0
    %489 = vmatpush2.msra.mxu0 0.0
    %490 = vmatprep.subr.mxu0 0.0
    %491 = vmatpush2.msra.mxu0 0.0
    %492 = vmatprep.subr.mxu0 0.0
    %493 = vmatpush2.msra.mxu0 0.0
    %494 = vmatprep.subr.mxu0 0.0
    %495 = vmatpush2.msra.mxu0 0.0
    %496 = vmatprep.subr.mxu0 0.0
    %497 = vmatpush2.msra.mxu0 0.0
    %498 = vmatprep.subr.mxu0 0.0
    %499 = vmatpush2.msra.mxu0 0.0
    %500 = vmatprep.subr.mxu0 0.0
    %501 = vmatpush2.msra.mxu0 0.0
    %502 = vmatprep.subr.mxu0 0.0
    %503 = vmatpush2.msra.mxu0 0.0
    %504 = vmatprep.subr.mxu0 0.0
    %505 = vmatpush2.msra.mxu0 0.0
    %506 = vmatprep.mubr.f32.mxu0 0.0
    %507 = vmatmul.mubr.f32.gmra.mxu0 %v342
    %v508 = vpop.f32.mrf.mxu0
    %v509 = vadd.f32 %v323, %v508
    %v510 = vpop.f32.mrf.mxu0
    %v511 = vadd.f32 %v323, %v510
    %512 = vmatprep.mubr.f32.mxu0 0.0
    %513 = vmatmul.mubr.f32.gmra.mxu0 %v345
    %v514 = vpop.f32.mrf.mxu0
    %v515 = vadd.f32 %v328, %v514
    %v516 = vpop.f32.mrf.mxu0
    %v517 = vadd.f32 %v328, %v516
    %518 = vmatprep.mubr.f32.mxu0 0.0
    %519 = vmatmul.mubr.f32.gmra.mxu0 %v348
    %v520 = vpop.f32.mrf.mxu0
    %v521 = vadd.f32 %v333, %v520
    %v522 = vpop.f32.mrf.mxu0
    %v523 = vadd.f32 %v333, %v522
    %524 = vmatprep.mubr.f32.mxu0 0.0
    %525 = vmatmul.mubr.f32.gmra.mxu0 %v351
    %v526 = vpop.f32.mrf.mxu0
    %v527 = vadd.f32 %v338, %v526
    %v528 = vpop.f32.mrf.mxu0
    %v529 = vadd.f32 %v338, %v528
    %530 = vdwg.mxu0
    %vm531 = vcmp.ge.f32.partialorder %v420, 0.0
    %vm532 = vcmp.ge.f32.partialorder %v422, 0.0
    %vm533 = vcmp.ge.f32.partialorder %v509, 0.0
    %vm534 = vcmp.ge.f32.partialorder %v511, 0.0
    %vm535 = vcmp.ge.f32.partialorder %v426, 0.0
    %vm536 = vcmp.ge.f32.partialorder %v428, 0.0
    %vm537 = vcmp.ge.f32.partialorder %v515, 0.0
    %vm538 = vcmp.ge.f32.partialorder %v517, 0.0
    %vm539 = vcmp.ge.f32.partialorder %v432, 0.0
    %vm540 = vcmp.ge.f32.partialorder %v434, 0.0
    %vm541 = vcmp.ge.f32.partialorder %v521, 0.0
    %vm542 = vcmp.ge.f32.partialorder %v523, 0.0
    %vm543 = vcmp.ge.f32.partialorder %v438, 0.0
    %vm544 = vcmp.ge.f32.partialorder %v440, 0.0
    %vm545 = vcmp.ge.f32.partialorder %v527, 0.0
    %vm546 = vcmp.ge.f32.partialorder %v529, 0.0
    %v547 = vmul.f32 %v420, 0.01
    %v548 = vmul.f32 %v422, 0.01
    %v549 = vmul.f32 %v509, 0.01
    %v550 = vmul.f32 %v511, 0.01
    %v551 = vmul.f32 %v426, 0.01
    %v552 = vmul.f32 %v428, 0.01
    %v553 = vmul.f32 %v515, 0.01
    %v554 = vmul.f32 %v517, 0.01
    %v555 = vmul.f32 %v432, 0.01
    %v556 = vmul.f32 %v434, 0.01
    %v557 = vmul.f32 %v521, 0.01
    %v558 = vmul.f32 %v523, 0.01
    %v559 = vmul.f32 %v438, 0.01
    %v560 = vmul.f32 %v440, 0.01
    %v561 = vmul.f32 %v527, 0.01
    %v562 = vmul.f32 %v529, 0.01
    %v563 = vsel %vm531, %v420, %v547
    %v564 = vsel %vm532, %v422, %v548
    %v565 = vsel %vm533, %v509, %v549
    %v566 = vsel %vm534, %v511, %v550
    %v567 = vsel %vm535, %v426, %v551
    %v568 = vsel %vm536, %v428, %v552
    %v569 = vsel %vm537, %v515, %v553
    %v570 = vsel %vm538, %v517, %v554
    %v571 = vsel %vm539, %v432, %v555
    %v572 = vsel %vm540, %v434, %v556
    %v573 = vsel %vm541, %v521, %v557
    %v574 = vsel %vm542, %v523, %v558
    %v575 = vsel %vm543, %v438, %v559
    %v576 = vsel %vm544, %v440, %v560
    %v577 = vsel %vm545, %v527, %v561
    %v578 = vsel %vm546, %v529, %v562
    %v579 = vld [vmem:[%s2 + $0x40] sm:$0xff]
    %v580 = vld [vmem:[%s3 + $0x40] sm:$0xff]
    %582 = vset.pattern.permute.xlu0 0
    %583 = vperm.xlu0 %582, %v580
    %v584 = vpop.permute.xlu0 %583
    %v587 = vsel %vm340, %v579, 0
    %589 = vmatprep.subr.mxu0 0.0
    %590 = vmatpush1.msra.mxu0 0.0
    %591 = vmatprep.subr.mxu0 0.0
    %592 = vmatpush1.msra.mxu0 0.0
    %593 = vmatprep.subr.mxu0 0.0
    %594 = vmatpush1.msra.mxu0 0.0
    %595 = vmatprep.subr.mxu0 0.0
    %596 = vmatpush1.msra.mxu0 0.0
    %597 = vmatprep.subr.mxu0 0.0
    %598 = vmatpush1.msra.mxu0 0.0
    %599 = vmatprep.subr.mxu0 0.0
    %600 = vmatpush1.msra.mxu0 0.0
    %601 = vmatprep.subr.mxu0 0.0
    %602 = vmatpush1.msra.mxu0 0.0
    %603 = vmatprep.subr.mxu0 0.0
    %604 = vmatpush1.msra.mxu0 0.0
    %605 = vmatprep.subr.mxu0 0.0
    %606 = vmatpush1.msra.mxu0 0.0
    %607 = vmatprep.subr.mxu0 0.0
    %608 = vmatpush1.msra.mxu0 0.0
    %609 = vmatprep.subr.mxu0 0.0
    %610 = vmatpush1.msra.mxu0 0.0
    %611 = vmatprep.subr.mxu0 0.0
    %612 = vmatpush1.msra.mxu0 0.0
    %613 = vmatprep.subr.mxu0 %v576
    %614 = vmatpush1.msra.mxu0 %v575
    %615 = vmatprep.subr.mxu0 %v572
    %616 = vmatpush1.msra.mxu0 %v571
    %617 = vmatprep.subr.mxu0 %v568
    %618 = vmatpush1.msra.mxu0 %v567
    %619 = vmatprep.subr.mxu0 %v564
    %620 = vmatpush1.msra.mxu0 %v563
    %621 = vmatprep.subr.mxu0 0.0
    %622 = vmatpush2.msra.mxu0 0.0
    %623 = vmatprep.subr.mxu0 0.0
    %624 = vmatpush2.msra.mxu0 0.0
    %625 = vmatprep.subr.mxu0 0.0
    %626 = vmatpush2.msra.mxu0 0.0
    %627 = vmatprep.subr.mxu0 0.0
    %628 = vmatpush2.msra.mxu0 0.0
    %629 = vmatprep.subr.mxu0 0.0
    %630 = vmatpush2.msra.mxu0 0.0
    %631 = vmatprep.subr.mxu0 0.0
    %632 = vmatpush2.msra.mxu0 0.0
    %633 = vmatprep.subr.mxu0 0.0
    %634 = vmatpush2.msra.mxu0 0.0
    %635 = vmatprep.subr.mxu0 0.0
    %636 = vmatpush2.msra.mxu0 0.0
    %637 = vmatprep.subr.mxu0 0.0
    %638 = vmatpush2.msra.mxu0 0.0
    %639 = vmatprep.subr.mxu0 0.0
    %640 = vmatpush2.msra.mxu0 0.0
    %641 = vmatprep.subr.mxu0 0.0
    %642 = vmatpush2.msra.mxu0 0.0
    %643 = vmatprep.subr.mxu0 0.0
    %644 = vmatpush2.msra.mxu0 0.0
    %645 = vmatprep.subr.mxu0 0.0
    %646 = vmatpush2.msra.mxu0 0.0
    %647 = vmatprep.subr.mxu0 0.0
    %648 = vmatpush2.msra.mxu0 0.0
    %649 = vmatprep.subr.mxu0 0.0
    %650 = vmatpush2.msra.mxu0 0.0
    %651 = vmatprep.subr.mxu0 0.0
    %652 = vmatpush2.msra.mxu0 0.0
    %653 = vmatprep.mubr.f32.mxu0 0.0
    %654 = vmatmul.mubr.f32.gmra.mxu0 %v587
    %v655 = vpop.f32.mrf.mxu0
    %v656 = vadd.f32 %v584, %v655
    %v657 = vpop.f32.mrf.mxu0
    %v658 = vadd.f32 %v584, %v657
    %659 = vdwg.mxu0
    %660 = vmatprep.subr.mxu0 0.0
    %661 = vmatpush1.msra.mxu0 0.0
    %662 = vmatprep.subr.mxu0 0.0
    %663 = vmatpush1.msra.mxu0 0.0
    %664 = vmatprep.subr.mxu0 0.0
    %665 = vmatpush1.msra.mxu0 0.0
    %666 = vmatprep.subr.mxu0 0.0
    %667 = vmatpush1.msra.mxu0 0.0
    %668 = vmatprep.subr.mxu0 0.0
    %669 = vmatpush1.msra.mxu0 0.0
    %670 = vmatprep.subr.mxu0 0.0
    %671 = vmatpush1.msra.mxu0 0.0
    %672 = vmatprep.subr.mxu0 0.0
    %673 = vmatpush1.msra.mxu0 0.0
    %674 = vmatprep.subr.mxu0 0.0
    %675 = vmatpush1.msra.mxu0 0.0
    %676 = vmatprep.subr.mxu0 0.0
    %677 = vmatpush1.msra.mxu0 0.0
    %678 = vmatprep.subr.mxu0 0.0
    %679 = vmatpush1.msra.mxu0 0.0
    %680 = vmatprep.subr.mxu0 0.0
    %681 = vmatpush1.msra.mxu0 0.0
    %682 = vmatprep.subr.mxu0 0.0
    %683 = vmatpush1.msra.mxu0 0.0
    %684 = vmatprep.subr.mxu0 %v578
    %685 = vmatpush1.msra.mxu0 %v577
    %686 = vmatprep.subr.mxu0 %v574
    %687 = vmatpush1.msra.mxu0 %v573
    %688 = vmatprep.subr.mxu0 %v570
    %689 = vmatpush1.msra.mxu0 %v569
    %690 = vmatprep.subr.mxu0 %v566
    %691 = vmatpush1.msra.mxu0 %v565
    %692 = vmatprep.subr.mxu0 0.0
    %693 = vmatpush2.msra.mxu0 0.0
    %694 = vmatprep.subr.mxu0 0.0
    %695 = vmatpush2.msra.mxu0 0.0
    %696 = vmatprep.subr.mxu0 0.0
    %697 = vmatpush2.msra.mxu0 0.0
    %698 = vmatprep.subr.mxu0 0.0
    %699 = vmatpush2.msra.mxu0 0.0
    %700 = vmatprep.subr.mxu0 0.0
    %701 = vmatpush2.msra.mxu0 0.0
    %702 = vmatprep.subr.mxu0 0.0
    %703 = vmatpush2.msra.mxu0 0.0
    %704 = vmatprep.subr.mxu0 0.0
    %705 = vmatpush2.msra.mxu0 0.0
    %706 = vmatprep.subr.mxu0 0.0
    %707 = vmatpush2.msra.mxu0 0.0
    %708 = vmatprep.subr.mxu0 0.0
    %709 = vmatpush2.msra.mxu0 0.0
    %710 = vmatprep.subr.mxu0 0.0
    %711 = vmatpush2.msra.mxu0 0.0
    %712 = vmatprep.subr.mxu0 0.0
    %713 = vmatpush2.msra.mxu0 0.0
    %714 = vmatprep.subr.mxu0 0.0
    %715 = vmatpush2.msra.mxu0 0.0
    %716 = vmatprep.subr.mxu0 0.0
    %717 = vmatpush2.msra.mxu0 0.0
    %718 = vmatprep.subr.mxu0 0.0
    %719 = vmatpush2.msra.mxu0 0.0
    %720 = vmatprep.subr.mxu0 0.0
    %721 = vmatpush2.msra.mxu0 0.0
    %722 = vmatprep.subr.mxu0 0.0
    %723 = vmatpush2.msra.mxu0 0.0
    %724 = vmatprep.mubr.f32.mxu0 0.0
    %725 = vmatmul.mubr.f32.gmra.mxu0 %v587
    %v726 = vpop.f32.mrf.mxu0
    %v727 = vadd.f32 %v584, %v726
    %v728 = vpop.f32.mrf.mxu0
    %v729 = vadd.f32 %v584, %v728
    %730 = vdwg.mxu0
    %v732 = vlaneseq
    %v733 = vshrl.u32 %v732, 7
    %v734 = vsub.s32 0, %v733
    %v735 = vrot.slane %v40, %v734
    %v736 = vlaneseq
    %v737 = vshrl.u32 %v736, 7
    %v738 = vsub.s32 1, %v737
    %v739 = vrot.slane %v40, %v738
    %v740 = vlaneseq
    %v741 = vshrl.u32 %v740, 7
    %v742 = vsub.s32 2, %v741
    %v743 = vrot.slane %v40, %v742
    %v744 = vlaneseq
    %v745 = vshrl.u32 %v744, 7
    %v746 = vsub.s32 3, %v745
    %v747 = vrot.slane %v40, %v746
    %v748 = vld [vmem:[%s2 + $0x48] sm:$0xff]
    %v749 = vld [vmem:[%s2 + $0x50] sm:$0xff]
    %v750 = vld [vmem:[%s2 + $0x58] sm:$0xff]
    %v751 = vld [vmem:[%s2 + $0x60] sm:$0xff]
    %v752 = vld [vmem:[%s2 + $0x68] sm:$0xff]
    %v753 = vld [vmem:[%s2 + $0x70] sm:$0xff]
    %v754 = vld [vmem:[%s2 + $0x78] sm:$0xff]
    %v755 = vld [vmem:[%s2 + $0x80] sm:$0xff]
    %v756 = vld [vmem:[%s3 + $0x48] sm:$0xff]
    %v757 = vld [vmem:[%s3 + $0x50] sm:$0xff]
    %v758 = vld [vmem:[%s3 + $0x58] sm:$0xff]
    %v759 = vld [vmem:[%s3 + $0x60] sm:$0xff]
    %v760 = vld [vmem:[%s3 + $0x68] sm:$0xff]
    %v761 = vld [vmem:[%s3 + $0x70] sm:$0xff]
    %v762 = vld [vmem:[%s3 + $0x78] sm:$0xff]
    %v763 = vld [vmem:[%s3 + $0x80] sm:$0xff]
    %765 = vset.pattern.permute.xlu0 0
    %766 = vperm.xlu0 %765, %v756
    %v767 = vpop.permute.xlu0 %766
    %770 = vset.pattern.permute.xlu0 0
    %771 = vperm.xlu0 %770, %v757
    %v772 = vpop.permute.xlu0 %771
    %775 = vset.pattern.permute.xlu0 0
    %776 = vperm.xlu0 %775, %v758
    %v777 = vpop.permute.xlu0 %776
    %780 = vset.pattern.permute.xlu0 0
    %781 = vperm.xlu0 %780, %v759
    %v782 = vpop.permute.xlu0 %781
    %785 = vset.pattern.permute.xlu0 0
    %786 = vperm.xlu0 %785, %v760
    %v787 = vpop.permute.xlu0 %786
    %790 = vset.pattern.permute.xlu0 0
    %791 = vperm.xlu0 %790, %v761
    %v792 = vpop.permute.xlu0 %791
    %795 = vset.pattern.permute.xlu0 0
    %796 = vperm.xlu0 %795, %v762
    %v797 = vpop.permute.xlu0 %796
    %800 = vset.pattern.permute.xlu0 0
    %801 = vperm.xlu0 %800, %v763
    %v802 = vpop.permute.xlu0 %801
    %vm804 = vcmask 72704
    %v806 = vsel %vm804, %v748, 0
    %v809 = vsel %vm804, %v749, 0
    %v812 = vsel %vm804, %v750, 0
    %v815 = vsel %vm804, %v751, 0
    %v818 = vsel %vm804, %v752, 0
    %v821 = vsel %vm804, %v753, 0
    %v824 = vsel %vm804, %v754, 0
    %v827 = vsel %vm804, %v755, 0
    %vm829 = vcmask 1040384
    %v830 = vsel %vm829, %v735, 0
    %v832 = vsel %vm829, %v739, 0
    %v834 = vsel %vm829, %v743, 0
    %v836 = vsel %vm829, %v747, 0
    %838 = vmatprep.subr.mxu0 0.0
    %839 = vmatpush1.msra.mxu0 0.0
    %840 = vmatprep.subr.mxu0 0.0
    %841 = vmatpush1.msra.mxu0 0.0
    %842 = vmatprep.subr.mxu0 0.0
    %843 = vmatpush1.msra.mxu0 0.0
    %844 = vmatprep.subr.mxu0 0.0
    %845 = vmatpush1.msra.mxu0 0.0
    %846 = vmatprep.subr.mxu0 0.0
    %847 = vmatpush1.msra.mxu0 0.0
    %848 = vmatprep.subr.mxu0 0.0
    %849 = vmatpush1.msra.mxu0 0.0
    %850 = vmatprep.subr.mxu0 0.0
    %851 = vmatpush1.msra.mxu0 0.0
    %852 = vmatprep.subr.mxu0 0.0
    %853 = vmatpush1.msra.mxu0 0.0
    %854 = vmatprep.subr.mxu0 0.0
    %855 = vmatpush1.msra.mxu0 0.0
    %856 = vmatprep.subr.mxu0 0.0
    %857 = vmatpush1.msra.mxu0 0.0
    %858 = vmatprep.subr.mxu0 0.0
    %859 = vmatpush1.msra.mxu0 0.0
    %860 = vmatprep.subr.mxu0 0.0
    %861 = vmatpush1.msra.mxu0 0.0
    %862 = vmatprep.subr.mxu0 0.0
    %863 = vmatpush1.msra.mxu0 0.0
    %864 = vmatprep.subr.mxu0 0.0
    %865 = vmatpush1.msra.mxu0 0.0
    %866 = vmatprep.subr.mxu0 %v832
    %867 = vmatpush1.msra.mxu0 %v830
    %868 = vmatprep.subr.mxu0 %v658
    %869 = vmatpush1.msra.mxu0 %v656
    %870 = vmatprep.subr.mxu0 0.0
    %871 = vmatpush2.msra.mxu0 0.0
    %872 = vmatprep.subr.mxu0 0.0
    %873 = vmatpush2.msra.mxu0 0.0
    %874 = vmatprep.subr.mxu0 0.0
    %875 = vmatpush2.msra.mxu0 0.0
    %876 = vmatprep.subr.mxu0 0.0
    %877 = vmatpush2.msra.mxu0 0.0
    %878 = vmatprep.subr.mxu0 0.0
    %879 = vmatpush2.msra.mxu0 0.0
    %880 = vmatprep.subr.mxu0 0.0
    %881 = vmatpush2.msra.mxu0 0.0
    %882 = vmatprep.subr.mxu0 0.0
    %883 = vmatpush2.msra.mxu0 0.0
    %884 = vmatprep.subr.mxu0 0.0
    %885 = vmatpush2.msra.mxu0 0.0
    %886 = vmatprep.subr.mxu0 0.0
    %887 = vmatpush2.msra.mxu0 0.0
    %888 = vmatprep.subr.mxu0 0.0
    %889 = vmatpush2.msra.mxu0 0.0
    %890 = vmatprep.subr.mxu0 0.0
    %891 = vmatpush2.msra.mxu0 0.0
    %892 = vmatprep.subr.mxu0 0.0
    %893 = vmatpush2.msra.mxu0 0.0
    %894 = vmatprep.subr.mxu0 0.0
    %895 = vmatpush2.msra.mxu0 0.0
    %896 = vmatprep.subr.mxu0 0.0
    %897 = vmatpush2.msra.mxu0 0.0
    %898 = vmatprep.subr.mxu0 0.0
    %899 = vmatpush2.msra.mxu0 0.0
    %900 = vmatprep.subr.mxu0 0.0
    %901 = vmatpush2.msra.mxu0 0.0
    %902 = vmatprep.mubr.f32.mxu0 0.0
    %903 = vmatmul.mubr.f32.gmra.mxu0 %v806
    %v904 = vpop.f32.mrf.mxu0
    %v905 = vadd.f32 %v767, %v904
    %v906 = vpop.f32.mrf.mxu0
    %v907 = vadd.f32 %v767, %v906
    %908 = vmatprep.mubr.f32.mxu0 0.0
    %909 = vmatmul.mubr.f32.gmra.mxu0 %v809
    %v910 = vpop.f32.mrf.mxu0
    %v911 = vadd.f32 %v772, %v910
    %v912 = vpop.f32.mrf.mxu0
    %v913 = vadd.f32 %v772, %v912
    %914 = vmatprep.mubr.f32.mxu0 0.0
    %915 = vmatmul.mubr.f32.gmra.mxu0 %v812
    %v916 = vpop.f32.mrf.mxu0
    %v917 = vadd.f32 %v777, %v916
    %v918 = vpop.f32.mrf.mxu0
    %v919 = vadd.f32 %v777, %v918
    %920 = vmatprep.mubr.f32.mxu0 0.0
    %921 = vmatmul.mubr.f32.gmra.mxu0 %v815
    %v922 = vpop.f32.mrf.mxu0
    %v923 = vadd.f32 %v782, %v922
    %v924 = vpop.f32.mrf.mxu0
    %v925 = vadd.f32 %v782, %v924
    %926 = vmatprep.mubr.f32.mxu0 0.0
    %927 = vmatmul.mubr.f32.gmra.mxu0 %v818
    %v928 = vpop.f32.mrf.mxu0
    %v929 = vadd.f32 %v787, %v928
    %v930 = vpop.f32.mrf.mxu0
    %v931 = vadd.f32 %v787, %v930
    %932 = vmatprep.mubr.f32.mxu0 0.0
    %933 = vmatmul.mubr.f32.gmra.mxu0 %v821
    %v934 = vpop.f32.mrf.mxu0
    %v935 = vadd.f32 %v792, %v934
    %v936 = vpop.f32.mrf.mxu0
    %v937 = vadd.f32 %v792, %v936
    %938 = vmatprep.mubr.f32.mxu0 0.0
    %939 = vmatmul.mubr.f32.gmra.mxu0 %v824
    %v940 = vpop.f32.mrf.mxu0
    %v941 = vadd.f32 %v797, %v940
    %v942 = vpop.f32.mrf.mxu0
    %v943 = vadd.f32 %v797, %v942
    %944 = vmatprep.mubr.f32.mxu0 0.0
    %945 = vmatmul.mubr.f32.gmra.mxu0 %v827
    %v946 = vpop.f32.mrf.mxu0
    %v947 = vadd.f32 %v802, %v946
    %v948 = vpop.f32.mrf.mxu0
    %v949 = vadd.f32 %v802, %v948
    %950 = vdwg.mxu0
    %951 = vmatprep.subr.mxu0 0.0
    %952 = vmatpush1.msra.mxu0 0.0
    %953 = vmatprep.subr.mxu0 0.0
    %954 = vmatpush1.msra.mxu0 0.0
    %955 = vmatprep.subr.mxu0 0.0
    %956 = vmatpush1.msra.mxu0 0.0
    %957 = vmatprep.subr.mxu0 0.0
    %958 = vmatpush1.msra.mxu0 0.0
    %959 = vmatprep.subr.mxu0 0.0
    %960 = vmatpush1.msra.mxu0 0.0
    %961 = vmatprep.subr.mxu0 0.0
    %962 = vmatpush1.msra.mxu0 0.0
    %963 = vmatprep.subr.mxu0 0.0
    %964 = vmatpush1.msra.mxu0 0.0
    %965 = vmatprep.subr.mxu0 0.0
    %966 = vmatpush1.msra.mxu0 0.0
    %967 = vmatprep.subr.mxu0 0.0
    %968 = vmatpush1.msra.mxu0 0.0
    %969 = vmatprep.subr.mxu0 0.0
    %970 = vmatpush1.msra.mxu0 0.0
    %971 = vmatprep.subr.mxu0 0.0
    %972 = vmatpush1.msra.mxu0 0.0
    %973 = vmatprep.subr.mxu0 0.0
    %974 = vmatpush1.msra.mxu0 0.0
    %975 = vmatprep.subr.mxu0 0.0
    %976 = vmatpush1.msra.mxu0 0.0
    %977 = vmatprep.subr.mxu0 0.0
    %978 = vmatpush1.msra.mxu0 0.0
    %979 = vmatprep.subr.mxu0 %v836
    %980 = vmatpush1.msra.mxu0 %v834
    %981 = vmatprep.subr.mxu0 %v729
    %982 = vmatpush1.msra.mxu0 %v727
    %983 = vmatprep.subr.mxu0 0.0
    %984 = vmatpush2.msra.mxu0 0.0
    %985 = vmatprep.subr.mxu0 0.0
    %986 = vmatpush2.msra.mxu0 0.0
    %987 = vmatprep.subr.mxu0 0.0
    %988 = vmatpush2.msra.mxu0 0.0
    %989 = vmatprep.subr.mxu0 0.0
    %990 = vmatpush2.msra.mxu0 0.0
    %991 = vmatprep.subr.mxu0 0.0
    %992 = vmatpush2.msra.mxu0 0.0
    %993 = vmatprep.subr.mxu0 0.0
    %994 = vmatpush2.msra.mxu0 0.0
    %995 = vmatprep.subr.mxu0 0.0
    %996 = vmatpush2.msra.mxu0 0.0
    %997 = vmatprep.subr.mxu0 0.0
    %998 = vmatpush2.msra.mxu0 0.0
    %999 = vmatprep.subr.mxu0 0.0
    %1000 = vmatpush2.msra.mxu0 0.0
    %1001 = vmatprep.subr.mxu0 0.0
    %1002 = vmatpush2.msra.mxu0 0.0
    %1003 = vmatprep.subr.mxu0 0.0
    %1004 = vmatpush2.msra.mxu0 0.0
    %1005 = vmatprep.subr.mxu0 0.0
    %1006 = vmatpush2.msra.mxu0 0.0
    %1007 = vmatprep.subr.mxu0 0.0
    %1008 = vmatpush2.msra.mxu0 0.0
    %1009 = vmatprep.subr.mxu0 0.0
    %1010 = vmatpush2.msra.mxu0 0.0
    %1011 = vmatprep.subr.mxu0 0.0
    %1012 = vmatpush2.msra.mxu0 0.0
    %1013 = vmatprep.subr.mxu0 0.0
    %1014 = vmatpush2.msra.mxu0 0.0
    %1015 = vmatprep.mubr.f32.mxu0 0.0
    %1016 = vmatmul.mubr.f32.gmra.mxu0 %v806
    %v1017 = vpop.f32.mrf.mxu0
    %v1018 = vadd.f32 %v767, %v1017
    %v1019 = vpop.f32.mrf.mxu0
    %v1020 = vadd.f32 %v767, %v1019
    %1021 = vmatprep.mubr.f32.mxu0 0.0
    %1022 = vmatmul.mubr.f32.gmra.mxu0 %v809
    %v1023 = vpop.f32.mrf.mxu0
    %v1024 = vadd.f32 %v772, %v1023
    %v1025 = vpop.f32.mrf.mxu0
    %v1026 = vadd.f32 %v772, %v1025
    %1027 = vmatprep.mubr.f32.mxu0 0.0
    %1028 = vmatmul.mubr.f32.gmra.mxu0 %v812
    %v1029 = vpop.f32.mrf.mxu0
    %v1030 = vadd.f32 %v777, %v1029
    %v1031 = vpop.f32.mrf.mxu0
    %v1032 = vadd.f32 %v777, %v1031
    %1033 = vmatprep.mubr.f32.mxu0 0.0
    %1034 = vmatmul.mubr.f32.gmra.mxu0 %v815
    %v1035 = vpop.f32.mrf.mxu0
    %v1036 = vadd.f32 %v782, %v1035
    %v1037 = vpop.f32.mrf.mxu0
    %v1038 = vadd.f32 %v782, %v1037
    %1039 = vmatprep.mubr.f32.mxu0 0.0
    %1040 = vmatmul.mubr.f32.gmra.mxu0 %v818
    %v1041 = vpop.f32.mrf.mxu0
    %v1042 = vadd.f32 %v787, %v1041
    %v1043 = vpop.f32.mrf.mxu0
    %v1044 = vadd.f32 %v787, %v1043
    %1045 = vmatprep.mubr.f32.mxu0 0.0
    %1046 = vmatmul.mubr.f32.gmra.mxu0 %v821
    %v1047 = vpop.f32.mrf.mxu0
    %v1048 = vadd.f32 %v792, %v1047
    %v1049 = vpop.f32.mrf.mxu0
    %v1050 = vadd.f32 %v792, %v1049
    %1051 = vmatprep.mubr.f32.mxu0 0.0
    %1052 = vmatmul.mubr.f32.gmra.mxu0 %v824
    %v1053 = vpop.f32.mrf.mxu0
    %v1054 = vadd.f32 %v797, %v1053
    %v1055 = vpop.f32.mrf.mxu0
    %v1056 = vadd.f32 %v797, %v1055
    %1057 = vmatprep.mubr.f32.mxu0 0.0
    %1058 = vmatmul.mubr.f32.gmra.mxu0 %v827
    %v1059 = vpop.f32.mrf.mxu0
    %v1060 = vadd.f32 %v802, %v1059
    %v1061 = vpop.f32.mrf.mxu0
    %v1062 = vadd.f32 %v802, %v1061
    %1063 = vdwg.mxu0
    %vm1064 = vcmp.ge.f32.partialorder %v905, 0.0
    %vm1065 = vcmp.ge.f32.partialorder %v907, 0.0
    %vm1066 = vcmp.ge.f32.partialorder %v1018, 0.0
    %vm1067 = vcmp.ge.f32.partialorder %v1020, 0.0
    %vm1068 = vcmp.ge.f32.partialorder %v911, 0.0
    %vm1069 = vcmp.ge.f32.partialorder %v913, 0.0
    %vm1070 = vcmp.ge.f32.partialorder %v1024, 0.0
    %vm1071 = vcmp.ge.f32.partialorder %v1026, 0.0
    %vm1072 = vcmp.ge.f32.partialorder %v917, 0.0
    %vm1073 = vcmp.ge.f32.partialorder %v919, 0.0
    %vm1074 = vcmp.ge.f32.partialorder %v1030, 0.0
    %vm1075 = vcmp.ge.f32.partialorder %v1032, 0.0
    %vm1076 = vcmp.ge.f32.partialorder %v923, 0.0
    %vm1077 = vcmp.ge.f32.partialorder %v925, 0.0
    %vm1078 = vcmp.ge.f32.partialorder %v1036, 0.0
    %vm1079 = vcmp.ge.f32.partialorder %v1038, 0.0
    %vm1080 = vcmp.ge.f32.partialorder %v929, 0.0
    %vm1081 = vcmp.ge.f32.partialorder %v931, 0.0
    %vm1082 = vcmp.ge.f32.partialorder %v1042, 0.0
    %vm1083 = vcmp.ge.f32.partialorder %v1044, 0.0
    %vm1084 = vcmp.ge.f32.partialorder %v935, 0.0
    %vm1085 = vcmp.ge.f32.partialorder %v937, 0.0
    %vm1086 = vcmp.ge.f32.partialorder %v1048, 0.0
    %vm1087 = vcmp.ge.f32.partialorder %v1050, 0.0
    %vm1088 = vcmp.ge.f32.partialorder %v941, 0.0
    %vm1089 = vcmp.ge.f32.partialorder %v943, 0.0
    %vm1090 = vcmp.ge.f32.partialorder %v1054, 0.0
    %vm1091 = vcmp.ge.f32.partialorder %v1056, 0.0
    %vm1092 = vcmp.ge.f32.partialorder %v947, 0.0
    %vm1093 = vcmp.ge.f32.partialorder %v949, 0.0
    %vm1094 = vcmp.ge.f32.partialorder %v1060, 0.0
    %vm1095 = vcmp.ge.f32.partialorder %v1062, 0.0
    %v1096 = vmul.f32 %v905, 0.01
    %v1097 = vmul.f32 %v907, 0.01
    %v1098 = vmul.f32 %v1018, 0.01
    %v1099 = vmul.f32 %v1020, 0.01
    %v1100 = vmul.f32 %v911, 0.01
    %v1101 = vmul.f32 %v913, 0.01
    %v1102 = vmul.f32 %v1024, 0.01
    %v1103 = vmul.f32 %v1026, 0.01
    %v1104 = vmul.f32 %v917, 0.01
    %v1105 = vmul.f32 %v919, 0.01
    %v1106 = vmul.f32 %v1030, 0.01
    %v1107 = vmul.f32 %v1032, 0.01
    %v1108 = vmul.f32 %v923, 0.01
    %v1109 = vmul.f32 %v925, 0.01
    %v1110 = vmul.f32 %v1036, 0.01
    %v1111 = vmul.f32 %v1038, 0.01
    %v1112 = vmul.f32 %v929, 0.01
    %v1113 = vmul.f32 %v931, 0.01
    %v1114 = vmul.f32 %v1042, 0.01
    %v1115 = vmul.f32 %v1044, 0.01
    %v1116 = vmul.f32 %v935, 0.01
    %v1117 = vmul.f32 %v937, 0.01
    %v1118 = vmul.f32 %v1048, 0.01
    %v1119 = vmul.f32 %v1050, 0.01
    %v1120 = vmul.f32 %v941, 0.01
    %v1121 = vmul.f32 %v943, 0.01
    %v1122 = vmul.f32 %v1054, 0.01
    %v1123 = vmul.f32 %v1056, 0.01
    %v1124 = vmul.f32 %v947, 0.01
    %v1125 = vmul.f32 %v949, 0.01
    %v1126 = vmul.f32 %v1060, 0.01
    %v1127 = vmul.f32 %v1062, 0.01
    %v1128 = vsel %vm1064, %v905, %v1096
    %v1129 = vsel %vm1065, %v907, %v1097
    %v1130 = vsel %vm1066, %v1018, %v1098
    %v1131 = vsel %vm1067, %v1020, %v1099
    %v1132 = vsel %vm1068, %v911, %v1100
    %v1133 = vsel %vm1069, %v913, %v1101
    %v1134 = vsel %vm1070, %v1024, %v1102
    %v1135 = vsel %vm1071, %v1026, %v1103
    %v1136 = vsel %vm1072, %v917, %v1104
    %v1137 = vsel %vm1073, %v919, %v1105
    %v1138 = vsel %vm1074, %v1030, %v1106
    %v1139 = vsel %vm1075, %v1032, %v1107
    %v1140 = vsel %vm1076, %v923, %v1108
    %v1141 = vsel %vm1077, %v925, %v1109
    %v1142 = vsel %vm1078, %v1036, %v1110
    %v1143 = vsel %vm1079, %v1038, %v1111
    %v1144 = vsel %vm1080, %v929, %v1112
    %v1145 = vsel %vm1081, %v931, %v1113
    %v1146 = vsel %vm1082, %v1042, %v1114
    %v1147 = vsel %vm1083, %v1044, %v1115
    %v1148 = vsel %vm1084, %v935, %v1116
    %v1149 = vsel %vm1085, %v937, %v1117
    %v1150 = vsel %vm1086, %v1048, %v1118
    %v1151 = vsel %vm1087, %v1050, %v1119
    %v1152 = vsel %vm1088, %v941, %v1120
    %v1153 = vsel %vm1089, %v943, %v1121
    %v1154 = vsel %vm1090, %v1054, %v1122
    %v1155 = vsel %vm1091, %v1056, %v1123
    %v1156 = vsel %vm1092, %v947, %v1124
    %v1157 = vsel %vm1093, %v949, %v1125
    %v1158 = vsel %vm1094, %v1060, %v1126
    %v1159 = vsel %vm1095, %v1062, %v1127
    %v1160 = vld [vmem:[%s2 + $0x88] sm:$0xff]
    %v1161 = vld [vmem:[%s2 + $0x90] sm:$0xff]
    %v1162 = vld [vmem:[%s2 + $0x98] sm:$0xff]
    %v1163 = vld [vmem:[%s2 + $0xa0] sm:$0xff]
    %v1164 = vld [vmem:[%s2 + $0xa8] sm:$0xff]
    %v1165 = vld [vmem:[%s2 + $0xb0] sm:$0xff]
    %v1166 = vld [vmem:[%s2 + $0xb8] sm:$0xff]
    %v1167 = vld [vmem:[%s2 + $0xc0] sm:$0xff]
    %v1168 = vld [vmem:[%s3 + $0x88] sm:$0xff]
    %v1169 = vld [vmem:[%s3 + $0x90] sm:$0xff]
    %v1170 = vld [vmem:[%s3 + $0x98] sm:$0xff]
    %v1171 = vld [vmem:[%s3 + $0xa0] sm:$0xff]
    %v1172 = vld [vmem:[%s3 + $0xa8] sm:$0xff]
    %v1173 = vld [vmem:[%s3 + $0xb0] sm:$0xff]
    %v1174 = vld [vmem:[%s3 + $0xb8] sm:$0xff]
    %v1175 = vld [vmem:[%s3 + $0xc0] sm:$0xff]
    %1177 = vset.pattern.permute.xlu0 0
    %1178 = vperm.xlu0 %1177, %v1168
    %v1179 = vpop.permute.xlu0 %1178
    %1182 = vset.pattern.permute.xlu0 0
    %1183 = vperm.xlu0 %1182, %v1169
    %v1184 = vpop.permute.xlu0 %1183
    %1187 = vset.pattern.permute.xlu0 0
    %1188 = vperm.xlu0 %1187, %v1170
    %v1189 = vpop.permute.xlu0 %1188
    %1192 = vset.pattern.permute.xlu0 0
    %1193 = vperm.xlu0 %1192, %v1171
    %v1194 = vpop.permute.xlu0 %1193
    %1197 = vset.pattern.permute.xlu0 0
    %1198 = vperm.xlu0 %1197, %v1172
    %v1199 = vpop.permute.xlu0 %1198
    %1202 = vset.pattern.permute.xlu0 0
    %1203 = vperm.xlu0 %1202, %v1173
    %v1204 = vpop.permute.xlu0 %1203
    %1207 = vset.pattern.permute.xlu0 0
    %1208 = vperm.xlu0 %1207, %v1174
    %v1209 = vpop.permute.xlu0 %1208
    %1212 = vset.pattern.permute.xlu0 0
    %1213 = vperm.xlu0 %1212, %v1175
    %v1214 = vpop.permute.xlu0 %1213
    %vm1216 = vcmask 523264
    %v1218 = vsel %vm1216, %v1160, 0
    %v1221 = vsel %vm1216, %v1161, 0
    %v1224 = vsel %vm1216, %v1162, 0
    %v1227 = vsel %vm1216, %v1163, 0
    %v1230 = vsel %vm1216, %v1164, 0
    %v1233 = vsel %vm1216, %v1165, 0
    %v1236 = vsel %vm1216, %v1166, 0
    %v1239 = vsel %vm1216, %v1167, 0
    %1241 = vmatprep.subr.mxu0 0.0
    %1242 = vmatpush1.msra.mxu0 0.0
    %1243 = vmatprep.subr.mxu0 0.0
    %1244 = vmatpush1.msra.mxu0 0.0
    %1245 = vmatprep.subr.mxu0 0.0
    %1246 = vmatpush1.msra.mxu0 0.0
    %1247 = vmatprep.subr.mxu0 0.0
    %1248 = vmatpush1.msra.mxu0 0.0
    %1249 = vmatprep.subr.mxu0 0.0
    %1250 = vmatpush1.msra.mxu0 0.0
    %1251 = vmatprep.subr.mxu0 0.0
    %1252 = vmatpush1.msra.mxu0 0.0
    %1253 = vmatprep.subr.mxu0 0.0
    %1254 = vmatpush1.msra.mxu0 0.0
    %1255 = vmatprep.subr.mxu0 0.0
    %1256 = vmatpush1.msra.mxu0 0.0
    %1257 = vmatprep.subr.mxu0 %v1157
    %1258 = vmatpush1.msra.mxu0 %v1156
    %1259 = vmatprep.subr.mxu0 %v1153
    %1260 = vmatpush1.msra.mxu0 %v1152
    %1261 = vmatprep.subr.mxu0 %v1149
    %1262 = vmatpush1.msra.mxu0 %v1148
    %1263 = vmatprep.subr.mxu0 %v1145
    %1264 = vmatpush1.msra.mxu0 %v1144
    %1265 = vmatprep.subr.mxu0 %v1141
    %1266 = vmatpush1.msra.mxu0 %v1140
    %1267 = vmatprep.subr.mxu0 %v1137
    %1268 = vmatpush1.msra.mxu0 %v1136
    %1269 = vmatprep.subr.mxu0 %v1133
    %1270 = vmatpush1.msra.mxu0 %v1132
    %1271 = vmatprep.subr.mxu0 %v1129
    %1272 = vmatpush1.msra.mxu0 %v1128
    %1273 = vmatprep.subr.mxu0 0.0
    %1274 = vmatpush2.msra.mxu0 0.0
    %1275 = vmatprep.subr.mxu0 0.0
    %1276 = vmatpush2.msra.mxu0 0.0
    %1277 = vmatprep.subr.mxu0 0.0
    %1278 = vmatpush2.msra.mxu0 0.0
    %1279 = vmatprep.subr.mxu0 0.0
    %1280 = vmatpush2.msra.mxu0 0.0
    %1281 = vmatprep.subr.mxu0 0.0
    %1282 = vmatpush2.msra.mxu0 0.0
    %1283 = vmatprep.subr.mxu0 0.0
    %1284 = vmatpush2.msra.mxu0 0.0
    %1285 = vmatprep.subr.mxu0 0.0
    %1286 = vmatpush2.msra.mxu0 0.0
    %1287 = vmatprep.subr.mxu0 0.0
    %1288 = vmatpush2.msra.mxu0 0.0
    %1289 = vmatprep.subr.mxu0 0.0
    %1290 = vmatpush2.msra.mxu0 0.0
    %1291 = vmatprep.subr.mxu0 0.0
    %1292 = vmatpush2.msra.mxu0 0.0
    %1293 = vmatprep.subr.mxu0 0.0
    %1294 = vmatpush2.msra.mxu0 0.0
    %1295 = vmatprep.subr.mxu0 0.0
    %1296 = vmatpush2.msra.mxu0 0.0
    %1297 = vmatprep.subr.mxu0 0.0
    %1298 = vmatpush2.msra.mxu0 0.0
    %1299 = vmatprep.subr.mxu0 0.0
    %1300 = vmatpush2.msra.mxu0 0.0
    %1301 = vmatprep.subr.mxu0 0.0
    %1302 = vmatpush2.msra.mxu0 0.0
    %1303 = vmatprep.subr.mxu0 0.0
    %1304 = vmatpush2.msra.mxu0 0.0
    %1305 = vmatprep.mubr.f32.mxu0 0.0
    %1306 = vmatmul.mubr.f32.gmra.mxu0 %v1218
    %v1307 = vpop.f32.mrf.mxu0
    %v1308 = vadd.f32 %v1179, %v1307
    %v1309 = vpop.f32.mrf.mxu0
    %v1310 = vadd.f32 %v1179, %v1309
    %1311 = vmatprep.mubr.f32.mxu0 0.0
    %1312 = vmatmul.mubr.f32.gmra.mxu0 %v1221
    %v1313 = vpop.f32.mrf.mxu0
    %v1314 = vadd.f32 %v1184, %v1313
    %v1315 = vpop.f32.mrf.mxu0
    %v1316 = vadd.f32 %v1184, %v1315
    %1317 = vmatprep.mubr.f32.mxu0 0.0
    %1318 = vmatmul.mubr.f32.gmra.mxu0 %v1224
    %v1319 = vpop.f32.mrf.mxu0
    %v1320 = vadd.f32 %v1189, %v1319
    %v1321 = vpop.f32.mrf.mxu0
    %v1322 = vadd.f32 %v1189, %v1321
    %1323 = vmatprep.mubr.f32.mxu0 0.0
    %1324 = vmatmul.mubr.f32.gmra.mxu0 %v1227
    %v1325 = vpop.f32.mrf.mxu0
    %v1326 = vadd.f32 %v1194, %v1325
    %v1327 = vpop.f32.mrf.mxu0
    %v1328 = vadd.f32 %v1194, %v1327
    %1329 = vmatprep.mubr.f32.mxu0 0.0
    %1330 = vmatmul.mubr.f32.gmra.mxu0 %v1230
    %v1331 = vpop.f32.mrf.mxu0
    %v1332 = vadd.f32 %v1199, %v1331
    %v1333 = vpop.f32.mrf.mxu0
    %v1334 = vadd.f32 %v1199, %v1333
    %1335 = vmatprep.mubr.f32.mxu0 0.0
    %1336 = vmatmul.mubr.f32.gmra.mxu0 %v1233
    %v1337 = vpop.f32.mrf.mxu0
    %v1338 = vadd.f32 %v1204, %v1337
    %v1339 = vpop.f32.mrf.mxu0
    %v1340 = vadd.f32 %v1204, %v1339
    %1341 = vmatprep.mubr.f32.mxu0 0.0
    %1342 = vmatmul.mubr.f32.gmra.mxu0 %v1236
    %v1343 = vpop.f32.mrf.mxu0
    %v1344 = vadd.f32 %v1209, %v1343
    %v1345 = vpop.f32.mrf.mxu0
    %v1346 = vadd.f32 %v1209, %v1345
    %1347 = vmatprep.mubr.f32.mxu0 0.0
    %1348 = vmatmul.mubr.f32.gmra.mxu0 %v1239
    %v1349 = vpop.f32.mrf.mxu0
    %v1350 = vadd.f32 %v1214, %v1349
    %v1351 = vpop.f32.mrf.mxu0
    %v1352 = vadd.f32 %v1214, %v1351
    %1353 = vdwg.mxu0
    %1354 = vmatprep.subr.mxu0 0.0
    %1355 = vmatpush1.msra.mxu0 0.0
    %1356 = vmatprep.subr.mxu0 0.0
    %1357 = vmatpush1.msra.mxu0 0.0
    %1358 = vmatprep.subr.mxu0 0.0
    %1359 = vmatpush1.msra.mxu0 0.0
    %1360 = vmatprep.subr.mxu0 0.0
    %1361 = vmatpush1.msra.mxu0 0.0
    %1362 = vmatprep.subr.mxu0 0.0
    %1363 = vmatpush1.msra.mxu0 0.0
    %1364 = vmatprep.subr.mxu0 0.0
    %1365 = vmatpush1.msra.mxu0 0.0
    %1366 = vmatprep.subr.mxu0 0.0
    %1367 = vmatpush1.msra.mxu0 0.0
    %1368 = vmatprep.subr.mxu0 0.0
    %1369 = vmatpush1.msra.mxu0 0.0
    %1370 = vmatprep.subr.mxu0 %v1159
    %1371 = vmatpush1.msra.mxu0 %v1158
    %1372 = vmatprep.subr.mxu0 %v1155
    %1373 = vmatpush1.msra.mxu0 %v1154
    %1374 = vmatprep.subr.mxu0 %v1151
    %1375 = vmatpush1.msra.mxu0 %v1150
    %1376 = vmatprep.subr.mxu0 %v1147
    %1377 = vmatpush1.msra.mxu0 %v1146
    %1378 = vmatprep.subr.mxu0 %v1143
    %1379 = vmatpush1.msra.mxu0 %v1142
    %1380 = vmatprep.subr.mxu0 %v1139
    %1381 = vmatpush1.msra.mxu0 %v1138
    %1382 = vmatprep.subr.mxu0 %v1135
    %1383 = vmatpush1.msra.mxu0 %v1134
    %1384 = vmatprep.subr.mxu0 %v1131
    %1385 = vmatpush1.msra.mxu0 %v1130
    %1386 = vmatprep.subr.mxu0 0.0
    %1387 = vmatpush2.msra.mxu0 0.0
    %1388 = vmatprep.subr.mxu0 0.0
    %1389 = vmatpush2.msra.mxu0 0.0
    %1390 = vmatprep.subr.mxu0 0.0
    %1391 = vmatpush2.msra.mxu0 0.0
    %1392 = vmatprep.subr.mxu0 0.0
    %1393 = vmatpush2.msra.mxu0 0.0
    %1394 = vmatprep.subr.mxu0 0.0
    %1395 = vmatpush2.msra.mxu0 0.0
    %1396 = vmatprep.subr.mxu0 0.0
    %1397 = vmatpush2.msra.mxu0 0.0
    %1398 = vmatprep.subr.mxu0 0.0
    %1399 = vmatpush2.msra.mxu0 0.0
    %1400 = vmatprep.subr.mxu0 0.0
    %1401 = vmatpush2.msra.mxu0 0.0
    %1402 = vmatprep.subr.mxu0 0.0
    %1403 = vmatpush2.msra.mxu0 0.0
    %1404 = vmatprep.subr.mxu0 0.0
    %1405 = vmatpush2.msra.mxu0 0.0
    %1406 = vmatprep.subr.mxu0 0.0
    %1407 = vmatpush2.msra.mxu0 0.0
    %1408 = vmatprep.subr.mxu0 0.0
    %1409 = vmatpush2.msra.mxu0 0.0
    %1410 = vmatprep.subr.mxu0 0.0
    %1411 = vmatpush2.msra.mxu0 0.0
    %1412 = vmatprep.subr.mxu0 0.0
    %1413 = vmatpush2.msra.mxu0 0.0
    %1414 = vmatprep.subr.mxu0 0.0
    %1415 = vmatpush2.msra.mxu0 0.0
    %1416 = vmatprep.subr.mxu0 0.0
    %1417 = vmatpush2.msra.mxu0 0.0
    %1418 = vmatprep.mubr.f32.mxu0 0.0
    %1419 = vmatmul.mubr.f32.gmra.mxu0 %v1218
    %v1420 = vpop.f32.mrf.mxu0
    %v1421 = vadd.f32 %v1179, %v1420
    %v1422 = vpop.f32.mrf.mxu0
    %v1423 = vadd.f32 %v1179, %v1422
    %1424 = vmatprep.mubr.f32.mxu0 0.0
    %1425 = vmatmul.mubr.f32.gmra.mxu0 %v1221
    %v1426 = vpop.f32.mrf.mxu0
    %v1427 = vadd.f32 %v1184, %v1426
    %v1428 = vpop.f32.mrf.mxu0
    %v1429 = vadd.f32 %v1184, %v1428
    %1430 = vmatprep.mubr.f32.mxu0 0.0
    %1431 = vmatmul.mubr.f32.gmra.mxu0 %v1224
    %v1432 = vpop.f32.mrf.mxu0
    %v1433 = vadd.f32 %v1189, %v1432
    %v1434 = vpop.f32.mrf.mxu0
    %v1435 = vadd.f32 %v1189, %v1434
    %1436 = vmatprep.mubr.f32.mxu0 0.0
    %1437 = vmatmul.mubr.f32.gmra.mxu0 %v1227
    %v1438 = vpop.f32.mrf.mxu0
    %v1439 = vadd.f32 %v1194, %v1438
    %v1440 = vpop.f32.mrf.mxu0
    %v1441 = vadd.f32 %v1194, %v1440
    %1442 = vmatprep.mubr.f32.mxu0 0.0
    %1443 = vmatmul.mubr.f32.gmra.mxu0 %v1230
    %v1444 = vpop.f32.mrf.mxu0
    %v1445 = vadd.f32 %v1199, %v1444
    %v1446 = vpop.f32.mrf.mxu0
    %v1447 = vadd.f32 %v1199, %v1446
    %1448 = vmatprep.mubr.f32.mxu0 0.0
    %1449 = vmatmul.mubr.f32.gmra.mxu0 %v1233
    %v1450 = vpop.f32.mrf.mxu0
    %v1451 = vadd.f32 %v1204, %v1450
    %v1452 = vpop.f32.mrf.mxu0
    %v1453 = vadd.f32 %v1204, %v1452
    %1454 = vmatprep.mubr.f32.mxu0 0.0
    %1455 = vmatmul.mubr.f32.gmra.mxu0 %v1236
    %v1456 = vpop.f32.mrf.mxu0
    %v1457 = vadd.f32 %v1209, %v1456
    %v1458 = vpop.f32.mrf.mxu0
    %v1459 = vadd.f32 %v1209, %v1458
    %1460 = vmatprep.mubr.f32.mxu0 0.0
    %1461 = vmatmul.mubr.f32.gmra.mxu0 %v1239
    %v1462 = vpop.f32.mrf.mxu0
    %v1463 = vadd.f32 %v1214, %v1462
    %v1464 = vpop.f32.mrf.mxu0
    %v1465 = vadd.f32 %v1214, %v1464
    %1466 = vdwg.mxu0
    %vm1467 = vcmp.ge.f32.partialorder %v1308, 0.0
    %vm1468 = vcmp.ge.f32.partialorder %v1310, 0.0
    %vm1469 = vcmp.ge.f32.partialorder %v1421, 0.0
    %vm1470 = vcmp.ge.f32.partialorder %v1423, 0.0
    %vm1471 = vcmp.ge.f32.partialorder %v1314, 0.0
    %vm1472 = vcmp.ge.f32.partialorder %v1316, 0.0
    %vm1473 = vcmp.ge.f32.partialorder %v1427, 0.0
    %vm1474 = vcmp.ge.f32.partialorder %v1429, 0.0
    %vm1475 = vcmp.ge.f32.partialorder %v1320, 0.0
    %vm1476 = vcmp.ge.f32.partialorder %v1322, 0.0
    %vm1477 = vcmp.ge.f32.partialorder %v1433, 0.0
    %vm1478 = vcmp.ge.f32.partialorder %v1435, 0.0
    %vm1479 = vcmp.ge.f32.partialorder %v1326, 0.0
    %vm1480 = vcmp.ge.f32.partialorder %v1328, 0.0
    %vm1481 = vcmp.ge.f32.partialorder %v1439, 0.0
    %vm1482 = vcmp.ge.f32.partialorder %v1441, 0.0
    %vm1483 = vcmp.ge.f32.partialorder %v1332, 0.0
    %vm1484 = vcmp.ge.f32.partialorder %v1334, 0.0
    %vm1485 = vcmp.ge.f32.partialorder %v1445, 0.0
    %vm1486 = vcmp.ge.f32.partialorder %v1447, 0.0
    %vm1487 = vcmp.ge.f32.partialorder %v1338, 0.0
    %vm1488 = vcmp.ge.f32.partialorder %v1340, 0.0
    %vm1489 = vcmp.ge.f32.partialorder %v1451, 0.0
    %vm1490 = vcmp.ge.f32.partialorder %v1453, 0.0
    %vm1491 = vcmp.ge.f32.partialorder %v1344, 0.0
    %vm1492 = vcmp.ge.f32.partialorder %v1346, 0.0
    %vm1493 = vcmp.ge.f32.partialorder %v1457, 0.0
    %vm1494 = vcmp.ge.f32.partialorder %v1459, 0.0
    %vm1495 = vcmp.ge.f32.partialorder %v1350, 0.0
    %vm1496 = vcmp.ge.f32.partialorder %v1352, 0.0
    %vm1497 = vcmp.ge.f32.partialorder %v1463, 0.0
    %vm1498 = vcmp.ge.f32.partialorder %v1465, 0.0
    %v1499 = vmul.f32 %v1308, 0.01
    %v1500 = vmul.f32 %v1310, 0.01
    %v1501 = vmul.f32 %v1421, 0.01
    %v1502 = vmul.f32 %v1423, 0.01
    %v1503 = vmul.f32 %v1314, 0.01
    %v1504 = vmul.f32 %v1316, 0.01
    %v1505 = vmul.f32 %v1427, 0.01
    %v1506 = vmul.f32 %v1429, 0.01
    %v1507 = vmul.f32 %v1320, 0.01
    %v1508 = vmul.f32 %v1322, 0.01
    %v1509 = vmul.f32 %v1433, 0.01
    %v1510 = vmul.f32 %v1435, 0.01
    %v1511 = vmul.f32 %v1326, 0.01
    %v1512 = vmul.f32 %v1328, 0.01
    %v1513 = vmul.f32 %v1439, 0.01
    %v1514 = vmul.f32 %v1441, 0.01
    %v1515 = vmul.f32 %v1332, 0.01
    %v1516 = vmul.f32 %v1334, 0.01
    %v1517 = vmul.f32 %v1445, 0.01
    %v1518 = vmul.f32 %v1447, 0.01
    %v1519 = vmul.f32 %v1338, 0.01
    %v1520 = vmul.f32 %v1340, 0.01
    %v1521 = vmul.f32 %v1451, 0.01
    %v1522 = vmul.f32 %v1453, 0.01
    %v1523 = vmul.f32 %v1344, 0.01
    %v1524 = vmul.f32 %v1346, 0.01
    %v1525 = vmul.f32 %v1457, 0.01
    %v1526 = vmul.f32 %v1459, 0.01
    %v1527 = vmul.f32 %v1350, 0.01
    %v1528 = vmul.f32 %v1352, 0.01
    %v1529 = vmul.f32 %v1463, 0.01
    %v1530 = vmul.f32 %v1465, 0.01
    %v1531 = vsel %vm1467, %v1308, %v1499
    %v1532 = vsel %vm1468, %v1310, %v1500
    %v1533 = vsel %vm1469, %v1421, %v1501
    %v1534 = vsel %vm1470, %v1423, %v1502
    %v1535 = vsel %vm1471, %v1314, %v1503
    %v1536 = vsel %vm1472, %v1316, %v1504
    %v1537 = vsel %vm1473, %v1427, %v1505
    %v1538 = vsel %vm1474, %v1429, %v1506
    %v1539 = vsel %vm1475, %v1320, %v1507
    %v1540 = vsel %vm1476, %v1322, %v1508
    %v1541 = vsel %vm1477, %v1433, %v1509
    %v1542 = vsel %vm1478, %v1435, %v1510
    %v1543 = vsel %vm1479, %v1326, %v1511
    %v1544 = vsel %vm1480, %v1328, %v1512
    %v1545 = vsel %vm1481, %v1439, %v1513
    %v1546 = vsel %vm1482, %v1441, %v1514
    %v1547 = vsel %vm1483, %v1332, %v1515
    %v1548 = vsel %vm1484, %v1334, %v1516
    %v1549 = vsel %vm1485, %v1445, %v1517
    %v1550 = vsel %vm1486, %v1447, %v1518
    %v1551 = vsel %vm1487, %v1338, %v1519
    %v1552 = vsel %vm1488, %v1340, %v1520
    %v1553 = vsel %vm1489, %v1451, %v1521
    %v1554 = vsel %vm1490, %v1453, %v1522
    %v1555 = vsel %vm1491, %v1344, %v1523
    %v1556 = vsel %vm1492, %v1346, %v1524
    %v1557 = vsel %vm1493, %v1457, %v1525
    %v1558 = vsel %vm1494, %v1459, %v1526
    %v1559 = vsel %vm1495, %v1350, %v1527
    %v1560 = vsel %vm1496, %v1352, %v1528
    %v1561 = vsel %vm1497, %v1463, %v1529
    %v1562 = vsel %vm1498, %v1465, %v1530
    %v1563 = vld [vmem:[%s2 + $0xc8] sm:$0x3]
    %v1564 = vld [vmem:[%s3 + $0xc8] sm:$0x3]
    %1566 = vset.pattern.permute.xlu0 0
    %1567 = vperm.xlu0 %1566, %v1564
    %v1568 = vpop.permute.xlu0 %1567
    %v1571 = vsel %vm1216, %v1563, 0
    %1573 = vmatprep.subr.mxu0 0.0
    %1574 = vmatpush1.msra.mxu0 0.0
    %1575 = vmatprep.subr.mxu0 0.0
    %1576 = vmatpush1.msra.mxu0 0.0
    %1577 = vmatprep.subr.mxu0 0.0
    %1578 = vmatpush1.msra.mxu0 0.0
    %1579 = vmatprep.subr.mxu0 0.0
    %1580 = vmatpush1.msra.mxu0 0.0
    %1581 = vmatprep.subr.mxu0 0.0
    %1582 = vmatpush1.msra.mxu0 0.0
    %1583 = vmatprep.subr.mxu0 0.0
    %1584 = vmatpush1.msra.mxu0 0.0
    %1585 = vmatprep.subr.mxu0 0.0
    %1586 = vmatpush1.msra.mxu0 0.0
    %1587 = vmatprep.subr.mxu0 0.0
    %1588 = vmatpush1.msra.mxu0 0.0
    %1589 = vmatprep.subr.mxu0 %v1560
    %1590 = vmatpush1.msra.mxu0 %v1559
    %1591 = vmatprep.subr.mxu0 %v1556
    %1592 = vmatpush1.msra.mxu0 %v1555
    %1593 = vmatprep.subr.mxu0 %v1552
    %1594 = vmatpush1.msra.mxu0 %v1551
    %1595 = vmatprep.subr.mxu0 %v1548
    %1596 = vmatpush1.msra.mxu0 %v1547
    %1597 = vmatprep.subr.mxu0 %v1544
    %1598 = vmatpush1.msra.mxu0 %v1543
    %1599 = vmatprep.subr.mxu0 %v1540
    %1600 = vmatpush1.msra.mxu0 %v1539
    %1601 = vmatprep.subr.mxu0 %v1536
    %1602 = vmatpush1.msra.mxu0 %v1535
    %1603 = vmatprep.subr.mxu0 %v1532
    %1604 = vmatpush1.msra.mxu0 %v1531
    %1605 = vmatprep.subr.mxu0 0.0
    %1606 = vmatpush2.msra.mxu0 0.0
    %1607 = vmatprep.subr.mxu0 0.0
    %1608 = vmatpush2.msra.mxu0 0.0
    %1609 = vmatprep.subr.mxu0 0.0
    %1610 = vmatpush2.msra.mxu0 0.0
    %1611 = vmatprep.subr.mxu0 0.0
    %1612 = vmatpush2.msra.mxu0 0.0
    %1613 = vmatprep.subr.mxu0 0.0
    %1614 = vmatpush2.msra.mxu0 0.0
    %1615 = vmatprep.subr.mxu0 0.0
    %1616 = vmatpush2.msra.mxu0 0.0
    %1617 = vmatprep.subr.mxu0 0.0
    %1618 = vmatpush2.msra.mxu0 0.0
    %1619 = vmatprep.subr.mxu0 0.0
    %1620 = vmatpush2.msra.mxu0 0.0
    %1621 = vmatprep.subr.mxu0 0.0
    %1622 = vmatpush2.msra.mxu0 0.0
    %1623 = vmatprep.subr.mxu0 0.0
    %1624 = vmatpush2.msra.mxu0 0.0
    %1625 = vmatprep.subr.mxu0 0.0
    %1626 = vmatpush2.msra.mxu0 0.0
    %1627 = vmatprep.subr.mxu0 0.0
    %1628 = vmatpush2.msra.mxu0 0.0
    %1629 = vmatprep.subr.mxu0 0.0
    %1630 = vmatpush2.msra.mxu0 0.0
    %1631 = vmatprep.subr.mxu0 0.0
    %1632 = vmatpush2.msra.mxu0 0.0
    %1633 = vmatprep.subr.mxu0 0.0
    %1634 = vmatpush2.msra.mxu0 0.0
    %1635 = vmatprep.subr.mxu0 0.0
    %1636 = vmatpush2.msra.mxu0 0.0
    %1637 = vmatprep.mubr.f32.mxu0 0.0
    %1638 = vmatmul.mubr.f32.gmra.mxu0 %v1571
    %v1639 = vpop.f32.mrf.mxu0
    %v1640 = vadd.f32 %v1568, %v1639
    %v1641 = vpop.f32.mrf.mxu0
    %v1642 = vadd.f32 %v1568, %v1641
    %1643 = vdwg.mxu0
    %1644 = vmatprep.subr.mxu0 0.0
    %1645 = vmatpush1.msra.mxu0 0.0
    %1646 = vmatprep.subr.mxu0 0.0
    %1647 = vmatpush1.msra.mxu0 0.0
    %1648 = vmatprep.subr.mxu0 0.0
    %1649 = vmatpush1.msra.mxu0 0.0
    %1650 = vmatprep.subr.mxu0 0.0
    %1651 = vmatpush1.msra.mxu0 0.0
    %1652 = vmatprep.subr.mxu0 0.0
    %1653 = vmatpush1.msra.mxu0 0.0
    %1654 = vmatprep.subr.mxu0 0.0
    %1655 = vmatpush1.msra.mxu0 0.0
    %1656 = vmatprep.subr.mxu0 0.0
    %1657 = vmatpush1.msra.mxu0 0.0
    %1658 = vmatprep.subr.mxu0 0.0
    %1659 = vmatpush1.msra.mxu0 0.0
    %1660 = vmatprep.subr.mxu0 %v1562
    %1661 = vmatpush1.msra.mxu0 %v1561
    %1662 = vmatprep.subr.mxu0 %v1558
    %1663 = vmatpush1.msra.mxu0 %v1557
    %1664 = vmatprep.subr.mxu0 %v1554
    %1665 = vmatpush1.msra.mxu0 %v1553
    %1666 = vmatprep.subr.mxu0 %v1550
    %1667 = vmatpush1.msra.mxu0 %v1549
    %1668 = vmatprep.subr.mxu0 %v1546
    %1669 = vmatpush1.msra.mxu0 %v1545
    %1670 = vmatprep.subr.mxu0 %v1542
    %1671 = vmatpush1.msra.mxu0 %v1541
    %1672 = vmatprep.subr.mxu0 %v1538
    %1673 = vmatpush1.msra.mxu0 %v1537
    %1674 = vmatprep.subr.mxu0 %v1534
    %1675 = vmatpush1.msra.mxu0 %v1533
    %1676 = vmatprep.subr.mxu0 0.0
    %1677 = vmatpush2.msra.mxu0 0.0
    %1678 = vmatprep.subr.mxu0 0.0
    %1679 = vmatpush2.msra.mxu0 0.0
    %1680 = vmatprep.subr.mxu0 0.0
    %1681 = vmatpush2.msra.mxu0 0.0
    %1682 = vmatprep.subr.mxu0 0.0
    %1683 = vmatpush2.msra.mxu0 0.0
    %1684 = vmatprep.subr.mxu0 0.0
    %1685 = vmatpush2.msra.mxu0 0.0
    %1686 = vmatprep.subr.mxu0 0.0
    %1687 = vmatpush2.msra.mxu0 0.0
    %1688 = vmatprep.subr.mxu0 0.0
    %1689 = vmatpush2.msra.mxu0 0.0
    %1690 = vmatprep.subr.mxu0 0.0
    %1691 = vmatpush2.msra.mxu0 0.0
    %1692 = vmatprep.subr.mxu0 0.0
    %1693 = vmatpush2.msra.mxu0 0.0
    %1694 = vmatprep.subr.mxu0 0.0
    %1695 = vmatpush2.msra.mxu0 0.0
    %1696 = vmatprep.subr.mxu0 0.0
    %1697 = vmatpush2.msra.mxu0 0.0
    %1698 = vmatprep.subr.mxu0 0.0
    %1699 = vmatpush2.msra.mxu0 0.0
    %1700 = vmatprep.subr.mxu0 0.0
    %1701 = vmatpush2.msra.mxu0 0.0
    %1702 = vmatprep.subr.mxu0 0.0
    %1703 = vmatpush2.msra.mxu0 0.0
    %1704 = vmatprep.subr.mxu0 0.0
    %1705 = vmatpush2.msra.mxu0 0.0
    %1706 = vmatprep.subr.mxu0 0.0
    %1707 = vmatpush2.msra.mxu0 0.0
    %1708 = vmatprep.mubr.f32.mxu0 0.0
    %1709 = vmatmul.mubr.f32.gmra.mxu0 %v1571
    %v1710 = vpop.f32.mrf.mxu0
    %v1711 = vadd.f32 %v1568, %v1710
    %v1712 = vpop.f32.mrf.mxu0
    %v1713 = vadd.f32 %v1568, %v1712
    %1714 = vdwg.mxu0
    %v1715 = vsub.f32 0.0, %v1640
    %v1716 = vsub.f32 0.0, %v1642
    %v1717 = vsub.f32 0.0, %v1711
    %v1718 = vsub.f32 0.0, %v1713
    %v1719 = vmul.f32 %v1715, 1.442695
    %v1720 = vpow.pop %v1719
    %v1721 = vmul.f32 %v1716, 1.442695
    %v1722 = vpow.pop %v1721
    %v1723 = vmul.f32 %v1717, 1.442695
    %v1724 = vpow.pop %v1723
    %v1725 = vmul.f32 %v1718, 1.442695
    %v1726 = vpow.pop %v1725
    %v1727 = vadd.f32 %v1720, 1.0
    %v1728 = vadd.f32 %v1722, 1.0
    %v1729 = vadd.f32 %v1724, 1.0
    %v1730 = vadd.f32 %v1726, 1.0
    %v1731 = vrcp.pop %v1727
    %v1732 = vrcp.pop %v1728
    %v1733 = vrcp.pop %v1729
    %v1734 = vrcp.pop %v1730
    %v1735 = vsub.f32 1.0, %v40
    %v1740 = vcombine.low %v1640, %v1642
    %v1741 = vcombine.low %v1711, %v1713
    %v1743 = vunpack.c.l.s4 1966171168
    %v1744 = vunpack.c.0.s8 %v1743
    %v1745 = vlaneseq
    %v1746 = vshrl.u32 %v1745, 7
    %v1747 = vsub.s32 %v1744, %v1746
    %v1748 = vrot.slane %v1740, %v1747
    %v1750 = vunpack.c.l.s4 1966171168
    %v1751 = vunpack.c.0.s8 %v1750
    %v1752 = vlaneseq
    %v1753 = vshrl.u32 %v1752, 7
    %v1754 = vsub.s32 %v1751, %v1753
    %v1755 = vrot.slane %v1741, %v1754
    %v1756 = vcombine.low %v1748, %v1755
    %v1758 = vunpack.c.l.s4 1966171168
    %v1759 = vunpack.c.0.s8 %v1758
    %v1760 = vlaneseq
    %v1761 = vshrl.u32 %v1760, 7
    %v1762 = vsub.s32 %v1759, %v1761
    %v1763 = vrot.slane %v1756, %v1762
    %v1765 = vmul.f32 %v1735, %v1763
    %v1766 = vlog2.pop %v1727
    %v1767 = vmul.f32 %v1766, 0.6931472
    %v1768 = vlog2.pop %v1728
    %v1769 = vmul.f32 %v1768, 0.6931472
    %v1770 = vlog2.pop %v1729
    %v1771 = vmul.f32 %v1770, 0.6931472
    %v1772 = vlog2.pop %v1730
    %v1773 = vmul.f32 %v1772, 0.6931472
    %v1778 = vcombine.low %v1767, %v1769
    %v1779 = vcombine.low %v1771, %v1773
    %v1781 = vunpack.c.l.s4 1966171168
    %v1782 = vunpack.c.0.s8 %v1781
    %v1783 = vlaneseq
    %v1784 = vshrl.u32 %v1783, 7
    %v1785 = vsub.s32 %v1782, %v1784
    %v1786 = vrot.slane %v1778, %v1785
    %v1788 = vunpack.c.l.s4 1966171168
    %v1789 = vunpack.c.0.s8 %v1788
    %v1790 = vlaneseq
    %v1791 = vshrl.u32 %v1790, 7
    %v1792 = vsub.s32 %v1789, %v1791
    %v1793 = vrot.slane %v1779, %v1792
    %v1794 = vcombine.low %v1786, %v1793
    %v1796 = vunpack.c.l.s4 1966171168
    %v1797 = vunpack.c.0.s8 %v1796
    %v1798 = vlaneseq
    %v1799 = vshrl.u32 %v1798, 7
    %v1800 = vsub.s32 %v1797, %v1799
    %v1801 = vrot.slane %v1794, %v1800
    %v1803 = vadd.f32 %v1765, %v1801
    %s1804 = sld [smem:[#allocation2]]
    %s1805 = sld [smem:[#allocation2 + $0x1]]
    %s1806 = sld [smem:[#allocation2 + $0x80]]
    %s1807 = sld [smem:[#allocation2 + $0x81]]
    %v1808 = vsub.f32 1.0, %v42
    %v1809 = vstv %s1804
    %v1810 = vmul.f32 %v1809, %v1808
    %v1811 = vmul.f32 %v1810, %v1735
    %v1812 = vstv %s1805
    %v1813 = vmul.f32 %v1812, %v1808
    %v1814 = vmul.f32 %v1813, %v40
    %v1815 = vadd.f32 %v1811, %v1814
    %v1816 = vstv %s1806
    %v1817 = vmul.f32 %v1816, %v42
    %v1818 = vmul.f32 %v1817, %v1735
    %v1819 = vadd.f32 %v1815, %v1818
    %v1820 = vstv %s1807
    %v1821 = vmul.f32 %v1820, %v42
    %v1822 = vmul.f32 %v1821, %v40
    %v1823 = vadd.f32 %v1819, %v1822
    %v1828 = vcombine.low %v1731, %v1732
    %v1829 = vcombine.low %v1733, %v1734
    %v1831 = vunpack.c.l.s4 1966171168
    %v1832 = vunpack.c.0.s8 %v1831
    %v1833 = vlaneseq
    %v1834 = vshrl.u32 %v1833, 7
    %v1835 = vsub.s32 %v1832, %v1834
    %v1836 = vrot.slane %v1828, %v1835
    %v1838 = vunpack.c.l.s4 1966171168
    %v1839 = vunpack.c.0.s8 %v1838
    %v1840 = vlaneseq
    %v1841 = vshrl.u32 %v1840, 7
    %v1842 = vsub.s32 %v1839, %v1841
    %v1843 = vrot.slane %v1829, %v1842
    %v1844 = vcombine.high %v1836, %v1843
    %v1846 = vunpack.c.l.s4 1966171168
    %v1847 = vunpack.c.0.s8 %v1846
    %v1848 = vlaneseq
    %v1849 = vshrl.u32 %v1848, 7
    %v1850 = vsub.s32 %v1847, %v1849
    %v1851 = vrot.slane %v1844, %v1850
    %v1853 = vsub.f32 %v42, %v1851
    %v1854 = vand.u32 2147483647, %v1853
    %v1855 = vmul.f32 %v1854, -1.0
    %v1856 = vmul.f32 %v1855, %v1823
    %v1857 = vmul.f32 %v1856, 0.0033333334
    %v1858 = vadd.f32 %v1803, %v1857
    %v1859 = vmul.f32 %v44, %v1858
    %v1860 = vcombine.low %v1836, %v1843
    %v1862 = vunpack.c.l.s4 1966171168
    %v1863 = vunpack.c.0.s8 %v1862
    %v1864 = vlaneseq
    %v1865 = vshrl.u32 %v1864, 7
    %v1866 = vsub.s32 %v1863, %v1865
    %v1867 = vrot.slane %v1860, %v1866
    %v1869 = vlaneseq
    %vm1870 = vcmp.ge.s32.totalorder %v1869, 0
    %vm1871 = vcmp.lt.s32.totalorder %v1869, 512
    %vm1872 = vmand %vm1870, %vm1871
    %1873 = vst.msk [vmem:[#allocation5] ss:$2 sm:$0xf] %vm1872, %v1867
    %s1874 = scalar_lea.vmem [#allocation5], 1
    %1875 = vst.msk [vmem:[%s1874] ss:$2 sm:$0xf] %vm1872, %v1859
    // Predicated region
    $region22: #{tpu_custom_call.1} parent=1 // pred_check
      _
    $region23: #{tpu_custom_call.1} parent=1 // pred_check_branch
      %1877 = sbr.rel (0) target = $region25
    $region24: #{tpu_custom_call.1} parent=1 // pred_region
      %s1879 = ssub.s32 128, 128
      %1880 = vsyncadd [#allocation3], %s1879
      %s1882 = sshll.u32 [#allocation5], 4
      %s1883 = int_to_ptr.vmem [resolvable:$true] %s1882
      %1885 = dma.vmem_to_hbm [thread:$0]  %s1883, 128, %s4, [#allocation3]
    $region25: #{tpu_custom_call.1} parent=1 // pred_fallthru
      _
    // Predicated region
    $region26: #{tpu_custom_call.1} parent=1 // pred_check
      _
    $region27: #{tpu_custom_call.1} parent=1 // pred_check_branch
      %1887 = sbr.rel (0) target = $region29
    $region28: #{tpu_custom_call.1} parent=1 // pred_region
      %1888 = dma.done [#allocation3], 128
    $region29: #{tpu_custom_call.1} parent=1 // pred_fallthru
      _
    %1889 = vsyncpa [#allocation3], 1
    %1890 = vsyncpa [#allocation4], 1

</llo_original>
